<compile_context>
chip_gen: v6e
topology: v6e:2x2x1
jax: 0.10.0
libtpu: 0.0.40
codegen_flags: <defaults>
</compile_context>

<pallas_src>
import math

import jax
import jax.numpy as jnp
from jax import lax
from jax.experimental import pallas as pl
from jax.experimental.pallas import tpu as pltpu

EMB = 32   # self.embedding_size
HID = 16   # self.hidden_size


def _bilstm_kernel(x_stack_ref,   # (seq, 2B, E)  stacked fwd/bwd embeddings
                   wih_ref,       # (E, 4H)       fused input->gate weights, cols [i|f|g|o]
                   whh_ref,       # (H, 4H)       fused hidden->gate weights, cols [i|f|g|o]
                   bias_ref,      # (1, 4H)       combined bias (b_ih + b_hh)
                   h2o_wL_ref,    # (H, Vpad)     h2o weight half acting on hLR (zero-padded)
                   h2o_wR_ref,    # (H, Vpad)     h2o weight half acting on hRL (zero-padded)
                   h2o_b_ref,     # (1, Vpad)     h2o bias, padded cols = -1e30
                   h0_ref,        # (1, H)        initial_hidden
                   c0_ref,        # (1, H)        initial_C
                   pred_ref,      # (seq*B, Vpad) output log-probs (padded vocab)
                   xg_ref,        # scratch (seq, 2B, 4H) precomputed X@Wih + bias
                   hLR_ref,       # scratch (seq+1, B, H)
                   hRL_ref):      # scratch (seq+1, B, H)
    seq, B2, E = x_stack_ref.shape
    B = B2 // 2
    H = h0_ref.shape[1]

    # ---- hoist all input-dependent gate pre-activations (and the bias) out of
    #      the serial recurrence: one matmul for every timestep & direction ----
    x_all = x_stack_ref[...].reshape(seq * B2, E)
    xg = jnp.dot(x_all, wih_ref[...], preferred_element_type=jnp.float32) + bias_ref[...]
    xg_ref[...] = xg.reshape(seq, B2, 4 * H)

    h0 = jnp.broadcast_to(h0_ref[...], (B2, H))
    c0 = jnp.broadcast_to(c0_ref[...], (B2, H))
    hLR_ref[0] = h0[:B]
    hRL_ref[seq] = h0[:B]

    whh = whh_ref[...]            # loaded once, reused across the unrolled loop

    # ---- fused recurrence: rows [0:B] run left->right over words 0..seq-1,
    #      rows [B:2B] run right->left over words seq-1..0 (shared LSTMCell) ----
    def step(t, carry):
        h, c = carry
        gates = xg_ref[t] + jnp.dot(h, whh, preferred_element_type=jnp.float32)   # (2B, 4H)
        i_g = jax.nn.sigmoid(gates[:, 0 * H:1 * H])
        f_g = jax.nn.sigmoid(gates[:, 1 * H:2 * H])
        g_g = jnp.tanh(gates[:, 2 * H:3 * H])
        o_g = jax.nn.sigmoid(gates[:, 3 * H:4 * H])
        c = f_g * c + i_g * g_g
        h = o_g * jnp.tanh(c)
        hLR_ref[t + 1] = h[:B]           # fwd direction consumed word t
        hRL_ref[seq - 1 - t] = h[B:]     # bwd direction consumed word seq-1-t
        return (h, c)

    lax.fori_loop(0, seq, step, (h0, c0), unroll=True)

    # ---- vectorized output stage: log_softmax(h2o(concat(hLR[i], hRL[i+1]))) ----
    hL = hLR_ref[pl.ds(0, seq), :, :].reshape(seq * B, H)   # hLR[i],   i = 0..seq-1
    hR = hRL_ref[pl.ds(1, seq), :, :].reshape(seq * B, H)   # hRL[i+1], i = 0..seq-1
    logits = (jnp.dot(hL, h2o_wL_ref[...], preferred_element_type=jnp.float32)
              + jnp.dot(hR, h2o_wR_ref[...], preferred_element_type=jnp.float32)
              + h2o_b_ref[...])                             # (seq*B, Vpad)
    m = jnp.max(logits, axis=-1, keepdims=True)
    z = logits - m
    lse = jnp.log(jnp.sum(jnp.exp(z), axis=-1, keepdims=True))
    pred_ref[...] = z - lse


def bilstm_lm_forward(input_batch, params):
    """input_batch: (seq_len, batch) int32 token ids -> (seq_len, batch, vocab) f32."""
    seq_len, batch = input_batch.shape
    vocab = params["embedding"].shape[0]
    H = HID
    vpad = max(128, ((vocab + 127) // 128) * 128)   # lane-dense output width

    # Glue: embedding gather + weight re-layout / padding (parameter plumbing only).
    w_seq = params["embedding"][input_batch].astype(jnp.float32)            # (seq, B, E)
    x_stack = jnp.concatenate([w_seq, w_seq[::-1]], axis=1)                 # (seq, 2B, E)
    wih_f = params["weight_ih"].T.astype(jnp.float32)                       # (E, 4H) cols [i|f|g|o]
    whh_f = params["weight_hh"].T.astype(jnp.float32)                       # (H, 4H)
    bias_f = (params["bias_ih"] + params["bias_hh"]).reshape(1, 4 * H)      # (1, 4H)
    h2o_wt = params["h2o_weight"].T.astype(jnp.float32)                     # (2H, vocab)
    h2o_wL = jnp.zeros((H, vpad), jnp.float32).at[:, :vocab].set(h2o_wt[:H])
    h2o_wR = jnp.zeros((H, vpad), jnp.float32).at[:, :vocab].set(h2o_wt[H:])
    # padded logit columns get bias -1e30 -> exp underflows to 0, softmax unchanged
    h2o_b = jnp.full((1, vpad), -1e30, jnp.float32).at[0, :vocab].set(params["h2o_bias"])

    kernel = pl.pallas_call(
        _bilstm_kernel,
        out_shape=jax.ShapeDtypeStruct((seq_len * batch, vpad), jnp.float32),
        in_specs=[pl.BlockSpec(memory_space=pltpu.MemorySpace.VMEM)] * 9,
        out_specs=pl.BlockSpec(memory_space=pltpu.MemorySpace.VMEM),
        scratch_shapes=[
            pltpu.VMEM((seq_len, 2 * batch, 4 * H), jnp.float32),  # precomputed X@Wih + b
            pltpu.VMEM((seq_len + 1, batch, H), jnp.float32),      # hLR tape
            pltpu.VMEM((seq_len + 1, batch, H), jnp.float32),      # hRL tape
        ],
    )
    out = kernel(x_stack, wih_f, whh_f, bias_f, h2o_wL, h2o_wR, h2o_b,
                 params["initial_hidden"], params["initial_C"])
    return out.reshape(seq_len, batch, vpad)[:, :, :vocab]


def reference_forward(input_batch, params):
    """Pure-JAX reference reproducing the PyTorch forward semantics."""
    seq_len, batch = input_batch.shape
    H = HID
    emb = params["embedding"][input_batch]                     # (seq, batch, E)
    wih, whh = params["weight_ih"], params["weight_hh"]
    b = params["bias_ih"] + params["bias_hh"]
    h0 = jnp.broadcast_to(params["initial_hidden"], (batch, H))
    c0 = jnp.broadcast_to(params["initial_C"], (batch, H))

    def cell(carry, x):
        h, c = carry
        gates = x @ wih.T + h @ whh.T + b
        i, f, g, o = jnp.split(gates, 4, axis=1)
        i, f, g, o = jax.nn.sigmoid(i), jax.nn.sigmoid(f), jnp.tanh(g), jax.nn.sigmoid(o)
        c = f * c + i * g
        h = o * jnp.tanh(c)
        return (h, c), h

    _, hs_fwd = lax.scan(cell, (h0, c0), emb)            # hs_fwd[t]  == hLR[t+1]
    _, hs_bwd = lax.scan(cell, (h0, c0), emb[::-1])      # hs_bwd[k]  == hRL[seq-1-k]
    hLR = jnp.concatenate([h0[None], hs_fwd], axis=0)            # (seq+1, batch, H)
    hRL = jnp.concatenate([hs_bwd[::-1], h0[None]], axis=0)      # (seq+1, batch, H)
    concat = jnp.concatenate([hLR[:seq_len], hRL[1:]], axis=-1)  # (seq, batch, 2H)
    logits = concat @ params["h2o_weight"].T + params["h2o_bias"]
    return jax.nn.log_softmax(logits, axis=-1)


if __name__ == "__main__":
    vocab_size = 50
    seq_len, batch = 8, 4

    key = jax.random.PRNGKey(0)
    keys = jax.random.split(key, 10)
    stdv = 1.0 / math.sqrt(HID)   # init_params: uniform(-stdv, stdv) on every parameter

    def u(k, shape):
        return jax.random.uniform(k, shape, jnp.float32, -stdv, stdv)

    params = {
        "embedding":      u(keys[0], (vocab_size, EMB)),
        "weight_ih":      u(keys[1], (4 * HID, EMB)),     # LSTMCell weight_ih (i,f,g,o)
        "weight_hh":      u(keys[2], (4 * HID, HID)),     # LSTMCell weight_hh
        "bias_ih":        u(keys[3], (4 * HID,)),
        "bias_hh":        u(keys[4], (4 * HID,)),
        "h2o_weight":     u(keys[5], (vocab_size, 2 * HID)),
        "h2o_bias":       u(keys[6], (vocab_size,)),
        "initial_hidden": u(keys[7], (1, HID)),
        "initial_C":      u(keys[8], (1, HID)),
    }
    tokens = jax.random.randint(keys[9], (seq_len, batch), 0, vocab_size, dtype=jnp.int32)

    out = bilstm_lm_forward(tokens, params)
    out = jax.block_until_ready(out)

    ref = reference_forward(tokens, params)
    assert out.shape == (seq_len, batch, vocab_size)
    assert jnp.allclose(out, ref, atol=1e-4, rtol=1e-4), "kernel/reference mismatch"
    print("KERNEL_OK")
</pallas_src>

<mosaic_0001>
module attributes {stable_mosaic.version = 11 : i64} {
  func.func @_bilstm_kernel(%arg0: memref<8x8x32xf32, #tpu.memory_space<vmem>>, %arg1: memref<32x64xf32, #tpu.memory_space<vmem>>, %arg2: memref<16x64xf32, #tpu.memory_space<vmem>>, %arg3: memref<1x64xf32, #tpu.memory_space<vmem>>, %arg4: memref<16x128xf32, #tpu.memory_space<vmem>>, %arg5: memref<16x128xf32, #tpu.memory_space<vmem>>, %arg6: memref<1x128xf32, #tpu.memory_space<vmem>>, %arg7: memref<1x16xf32, #tpu.memory_space<vmem>>, %arg8: memref<1x16xf32, #tpu.memory_space<vmem>>, %arg9: memref<32x128xf32, #tpu.memory_space<vmem>>, %arg10: memref<8x8x64xf32, #tpu.memory_space<vmem>>, %arg11: memref<9x4x16xf32, #tpu.memory_space<vmem>>, %arg12: memref<9x4x16xf32, #tpu.memory_space<vmem>>) attributes {dimension_semantics = [], scalar_prefetch = 0 : i64, scratch_operands = 3 : i64, tpu.core_type = #tpu.core_type<tc>} {
    %c0 = arith.constant 0 : index
    %c0_0 = arith.constant 0 : index
    %c0_1 = arith.constant 0 : index
    %0 = vector.load %arg0[%c0, %c0_0, %c0_1] : memref<8x8x32xf32, #tpu.memory_space<vmem>>, vector<8x8x32xf32>
    %1 = vector.shape_cast %0 : vector<8x8x32xf32> to vector<64x32xf32>
    %c0_2 = arith.constant 0 : index
    %c0_3 = arith.constant 0 : index
    %2 = vector.load %arg1[%c0_2, %c0_3] : memref<32x64xf32, #tpu.memory_space<vmem>>, vector<32x64xf32>
    %cst = arith.constant dense<0.000000e+00> : vector<64x64xf32>
    %3 = tpu.matmul %1, %2, %cst {dimension_numbers = #tpu.dot_dimension_numbers<[1], [0], [0], [1], [0, 0, 1, 1], [], []>} : vector<64x32xf32>, vector<32x64xf32>, vector<64x64xf32> -> vector<64x64xf32>
    %c0_4 = arith.constant 0 : index
    %c0_5 = arith.constant 0 : index
    %4 = vector.load %arg3[%c0_4, %c0_5] : memref<1x64xf32, #tpu.memory_space<vmem>>, vector<1x64xf32>
    %5 = vector.broadcast %4 : vector<1x64xf32> to vector<64x64xf32>
    %6 = arith.addf %3, %5 : vector<64x64xf32>
    %7 = vector.shape_cast %6 : vector<64x64xf32> to vector<8x8x64xf32>
    %c0_6 = arith.constant 0 : index
    %c0_7 = arith.constant 0 : index
    %c0_8 = arith.constant 0 : index
    %8 = vector.load %arg10[%c0_6, %c0_7, %c0_8] : memref<8x8x64xf32, #tpu.memory_space<vmem>>, vector<8x8x64xf32>
    tpu.vector_store %arg10[%c0_6, %c0_7, %c0_8], %7 {strides = array<i32>} : memref<8x8x64xf32, #tpu.memory_space<vmem>>, vector<8x8x64xf32>,
    %c0_9 = arith.constant 0 : index
    %c0_10 = arith.constant 0 : index
    %9 = vector.load %arg7[%c0_9, %c0_10] : memref<1x16xf32, #tpu.memory_space<vmem>>, vector<1x16xf32>
    %10 = vector.shape_cast %9 : vector<1x16xf32> to vector<1x16xf32>
    %11 = vector.broadcast %10 : vector<1x16xf32> to vector<8x16xf32>
    %c0_11 = arith.constant 0 : index
    %c0_12 = arith.constant 0 : index
    %12 = vector.load %arg8[%c0_11, %c0_12] : memref<1x16xf32, #tpu.memory_space<vmem>>, vector<1x16xf32>
    %13 = vector.shape_cast %12 : vector<1x16xf32> to vector<1x16xf32>
    %14 = vector.broadcast %13 : vector<1x16xf32> to vector<8x16xf32>
    %15 = vector.extract_strided_slice %11 {offsets = [0, 0], sizes = [4, 16], strides = [1, 1]} : vector<8x16xf32> to vector<4x16xf32>
    %c0_13 = arith.constant 0 : index
    %c0_14 = arith.constant 0 : index
    %c0_15 = arith.constant 0 : index
    %16 = vector.load %arg11[%c0_13, %c0_14, %c0_15] : memref<9x4x16xf32, #tpu.memory_space<vmem>>, vector<1x4x16xf32>
    %17 = vector.shape_cast %16 : vector<1x4x16xf32> to vector<4x16xf32>
    %18 = vector.shape_cast %15 : vector<4x16xf32> to vector<1x4x16xf32>
    tpu.vector_store %arg11[%c0_13, %c0_14, %c0_15], %18 {strides = array<i32>} : memref<9x4x16xf32, #tpu.memory_space<vmem>>, vector<1x4x16xf32>,
    %19 = vector.extract_strided_slice %11 {offsets = [0, 0], sizes = [4, 16], strides = [1, 1]} : vector<8x16xf32> to vector<4x16xf32>
    %c8 = arith.constant 8 : index
    %c0_16 = arith.constant 0 : index
    %c0_17 = arith.constant 0 : index
    %20 = vector.load %arg12[%c8, %c0_16, %c0_17] : memref<9x4x16xf32, #tpu.memory_space<vmem>>, vector<1x4x16xf32>
    %21 = vector.shape_cast %20 : vector<1x4x16xf32> to vector<4x16xf32>
    %22 = vector.shape_cast %19 : vector<4x16xf32> to vector<1x4x16xf32>
    tpu.vector_store %arg12[%c8, %c0_16, %c0_17], %22 {strides = array<i32>} : memref<9x4x16xf32, #tpu.memory_space<vmem>>, vector<1x4x16xf32>,
    %c0_18 = arith.constant 0 : index
    %c0_19 = arith.constant 0 : index
    %23 = vector.load %arg2[%c0_18, %c0_19] : memref<16x64xf32, #tpu.memory_space<vmem>>, vector<16x64xf32>
    %c0_i32 = arith.constant 0 : i32
    %24 = arith.index_cast %c0_i32 : i32 to index
    %c0_20 = arith.constant 0 : index
    %c0_21 = arith.constant 0 : index
    %25 = vector.load %arg10[%24, %c0_20, %c0_21] : memref<8x8x64xf32, #tpu.memory_space<vmem>>, vector<1x8x64xf32>
    %26 = vector.shape_cast %25 : vector<1x8x64xf32> to vector<8x64xf32>
    %cst_22 = arith.constant dense<0.000000e+00> : vector<8x64xf32>
    %27 = tpu.matmul %11, %23, %cst_22 {dimension_numbers = #tpu.dot_dimension_numbers<[1], [0], [0], [1], [0, 0, 1, 1], [], []>} : vector<8x16xf32>, vector<16x64xf32>, vector<8x64xf32> -> vector<8x64xf32>
    %28 = arith.addf %26, %27 : vector<8x64xf32>
    %29 = vector.extract_strided_slice %28 {offsets = [0, 0], sizes = [8, 16], strides = [1, 1]} : vector<8x64xf32> to vector<8x16xf32>
    %30 = arith.negf %29 : vector<8x16xf32>
    %31 = math.exp %30 : vector<8x16xf32>
    %cst_23 = arith.constant 1.000000e+00 : f32
    %32 = vector.broadcast %cst_23 : f32 to vector<8x16xf32>
    %33 = arith.addf %32, %31 : vector<8x16xf32>
    %34 = arith.divf %32, %33 : vector<8x16xf32>
    %35 = vector.extract_strided_slice %28 {offsets = [0, 16], sizes = [8, 16], strides = [1, 1]} : vector<8x64xf32> to vector<8x16xf32>
    %36 = arith.negf %35 : vector<8x16xf32>
    %37 = math.exp %36 : vector<8x16xf32>
    %cst_24 = arith.constant 1.000000e+00 : f32
    %38 = vector.broadcast %cst_24 : f32 to vector<8x16xf32>
    %39 = arith.addf %38, %37 : vector<8x16xf32>
    %40 = arith.divf %38, %39 : vector<8x16xf32>
    %41 = vector.extract_strided_slice %28 {offsets = [0, 32], sizes = [8, 16], strides = [1, 1]} : vector<8x64xf32> to vector<8x16xf32>
    %42 = math.tanh %41 : vector<8x16xf32>
    %43 = vector.extract_strided_slice %28 {offsets = [0, 48], sizes = [8, 16], strides = [1, 1]} : vector<8x64xf32> to vector<8x16xf32>
    %44 = arith.negf %43 : vector<8x16xf32>
    %45 = math.exp %44 : vector<8x16xf32>
    %cst_25 = arith.constant 1.000000e+00 : f32
    %46 = vector.broadcast %cst_25 : f32 to vector<8x16xf32>
    %47 = arith.addf %46, %45 : vector<8x16xf32>
    %48 = arith.divf %46, %47 : vector<8x16xf32>
    %49 = arith.mulf %40, %14 : vector<8x16xf32>
    %50 = arith.mulf %34, %42 : vector<8x16xf32>
    %51 = arith.addf %49, %50 : vector<8x16xf32>
    %52 = math.tanh %51 : vector<8x16xf32>
    %53 = arith.mulf %48, %52 : vector<8x16xf32>
    %54 = vector.extract_strided_slice %53 {offsets = [0, 0], sizes = [4, 16], strides = [1, 1]} : vector<8x16xf32> to vector<4x16xf32>
    %c1_i32 = arith.constant 1 : i32
    %55 = arith.addi %c0_i32, %c1_i32 : i32
    %56 = arith.index_cast %55 : i32 to index
    %c0_26 = arith.constant 0 : index
    %c0_27 = arith.constant 0 : index
    %57 = vector.load %arg11[%56, %c0_26, %c0_27] : memref<9x4x16xf32, #tpu.memory_space<vmem>>, vector<1x4x16xf32>
    %58 = vector.shape_cast %57 : vector<1x4x16xf32> to vector<4x16xf32>
    %59 = vector.shape_cast %54 : vector<4x16xf32> to vector<1x4x16xf32>
    tpu.vector_store %arg11[%56, %c0_26, %c0_27], %59 {strides = array<i32>} : memref<9x4x16xf32, #tpu.memory_space<vmem>>, vector<1x4x16xf32>,
    %60 = vector.extract_strided_slice %53 {offsets = [4, 0], sizes = [4, 16], strides = [1, 1]} : vector<8x16xf32> to vector<4x16xf32>
    %c7_i32 = arith.constant 7 : i32
    %61 = arith.subi %c7_i32, %c0_i32 : i32
    %62 = arith.index_cast %61 : i32 to index
    %c0_28 = arith.constant 0 : index
    %c0_29 = arith.constant 0 : index
    %63 = vector.load %arg12[%62, %c0_28, %c0_29] : memref<9x4x16xf32, #tpu.memory_space<vmem>>, vector<1x4x16xf32>
    %64 = vector.shape_cast %63 : vector<1x4x16xf32> to vector<4x16xf32>
    %65 = vector.shape_cast %60 : vector<4x16xf32> to vector<1x4x16xf32>
    tpu.vector_store %arg12[%62, %c0_28, %c0_29], %65 {strides = array<i32>} : memref<9x4x16xf32, #tpu.memory_space<vmem>>, vector<1x4x16xf32>,
    %c1_i32_30 = arith.constant 1 : i32
    %66 = arith.index_cast %c1_i32_30 : i32 to index
    %c0_31 = arith.constant 0 : index
    %c0_32 = arith.constant 0 : index
    %67 = vector.load %arg10[%66, %c0_31, %c0_32] : memref<8x8x64xf32, #tpu.memory_space<vmem>>, vector<1x8x64xf32>
    %68 = vector.shape_cast %67 : vector<1x8x64xf32> to vector<8x64xf32>
    %cst_33 = arith.constant dense<0.000000e+00> : vector<8x64xf32>
    %69 = tpu.matmul %53, %23, %cst_33 {dimension_numbers = #tpu.dot_dimension_numbers<[1], [0], [0], [1], [0, 0, 1, 1], [], []>} : vector<8x16xf32>, vector<16x64xf32>, vector<8x64xf32> -> vector<8x64xf32>
    %70 = arith.addf %68, %69 : vector<8x64xf32>
    %71 = vector.extract_strided_slice %70 {offsets = [0, 0], sizes = [8, 16], strides = [1, 1]} : vector<8x64xf32> to vector<8x16xf32>
    %72 = arith.negf %71 : vector<8x16xf32>
    %73 = math.exp %72 : vector<8x16xf32>
    %cst_34 = arith.constant 1.000000e+00 : f32
    %74 = vector.broadcast %cst_34 : f32 to vector<8x16xf32>
    %75 = arith.addf %74, %73 : vector<8x16xf32>
    %76 = arith.divf %74, %75 : vector<8x16xf32>
    %77 = vector.extract_strided_slice %70 {offsets = [0, 16], sizes = [8, 16], strides = [1, 1]} : vector<8x64xf32> to vector<8x16xf32>
    %78 = arith.negf %77 : vector<8x16xf32>
    %79 = math.exp %78 : vector<8x16xf32>
    %cst_35 = arith.constant 1.000000e+00 : f32
    %80 = vector.broadcast %cst_35 : f32 to vector<8x16xf32>
    %81 = arith.addf %80, %79 : vector<8x16xf32>
    %82 = arith.divf %80, %81 : vector<8x16xf32>
    %83 = vector.extract_strided_slice %70 {offsets = [0, 32], sizes = [8, 16], strides = [1, 1]} : vector<8x64xf32> to vector<8x16xf32>
    %84 = math.tanh %83 : vector<8x16xf32>
    %85 = vector.extract_strided_slice %70 {offsets = [0, 48], sizes = [8, 16], strides = [1, 1]} : vector<8x64xf32> to vector<8x16xf32>
    %86 = arith.negf %85 : vector<8x16xf32>
    %87 = math.exp %86 : vector<8x16xf32>
    %cst_36 = arith.constant 1.000000e+00 : f32
    %88 = vector.broadcast %cst_36 : f32 to vector<8x16xf32>
    %89 = arith.addf %88, %87 : vector<8x16xf32>
    %90 = arith.divf %88, %89 : vector<8x16xf32>
    %91 = arith.mulf %82, %51 : vector<8x16xf32>
    %92 = arith.mulf %76, %84 : vector<8x16xf32>
    %93 = arith.addf %91, %92 : vector<8x16xf32>
    %94 = math.tanh %93 : vector<8x16xf32>
    %95 = arith.mulf %90, %94 : vector<8x16xf32>
    %96 = vector.extract_strided_slice %95 {offsets = [0, 0], sizes = [4, 16], strides = [1, 1]} : vector<8x16xf32> to vector<4x16xf32>
    %c1_i32_37 = arith.constant 1 : i32
    %97 = arith.addi %c1_i32_30, %c1_i32_37 : i32
    %98 = arith.index_cast %97 : i32 to index
    %c0_38 = arith.constant 0 : index
    %c0_39 = arith.constant 0 : index
    %99 = vector.load %arg11[%98, %c0_38, %c0_39] : memref<9x4x16xf32, #tpu.memory_space<vmem>>, vector<1x4x16xf32>
    %100 = vector.shape_cast %99 : vector<1x4x16xf32> to vector<4x16xf32>
    %101 = vector.shape_cast %96 : vector<4x16xf32> to vector<1x4x16xf32>
    tpu.vector_store %arg11[%98, %c0_38, %c0_39], %101 {strides = array<i32>} : memref<9x4x16xf32, #tpu.memory_space<vmem>>, vector<1x4x16xf32>,
    %102 = vector.extract_strided_slice %95 {offsets = [4, 0], sizes = [4, 16], strides = [1, 1]} : vector<8x16xf32> to vector<4x16xf32>
    %c7_i32_40 = arith.constant 7 : i32
    %103 = arith.subi %c7_i32_40, %c1_i32_30 : i32
    %104 = arith.index_cast %103 : i32 to index
    %c0_41 = arith.constant 0 : index
    %c0_42 = arith.constant 0 : index
    %105 = vector.load %arg12[%104, %c0_41, %c0_42] : memref<9x4x16xf32, #tpu.memory_space<vmem>>, vector<1x4x16xf32>
    %106 = vector.shape_cast %105 : vector<1x4x16xf32> to vector<4x16xf32>
    %107 = vector.shape_cast %102 : vector<4x16xf32> to vector<1x4x16xf32>
    tpu.vector_store %arg12[%104, %c0_41, %c0_42], %107 {strides = array<i32>} : memref<9x4x16xf32, #tpu.memory_space<vmem>>, vector<1x4x16xf32>,
    %c2_i32 = arith.constant 2 : i32
    %108 = arith.index_cast %c2_i32 : i32 to index
    %c0_43 = arith.constant 0 : index
    %c0_44 = arith.constant 0 : index
    %109 = vector.load %arg10[%108, %c0_43, %c0_44] : memref<8x8x64xf32, #tpu.memory_space<vmem>>, vector<1x8x64xf32>
    %110 = vector.shape_cast %109 : vector<1x8x64xf32> to vector<8x64xf32>
    %cst_45 = arith.constant dense<0.000000e+00> : vector<8x64xf32>
    %111 = tpu.matmul %95, %23, %cst_45 {dimension_numbers = #tpu.dot_dimension_numbers<[1], [0], [0], [1], [0, 0, 1, 1], [], []>} : vector<8x16xf32>, vector<16x64xf32>, vector<8x64xf32> -> vector<8x64xf32>
    %112 = arith.addf %110, %111 : vector<8x64xf32>
    %113 = vector.extract_strided_slice %112 {offsets = [0, 0], sizes = [8, 16], strides = [1, 1]} : vector<8x64xf32> to vector<8x16xf32>
    %114 = arith.negf %113 : vector<8x16xf32>
    %115 = math.exp %114 : vector<8x16xf32>
    %cst_46 = arith.constant 1.000000e+00 : f32
    %116 = vector.broadcast %cst_46 : f32 to vector<8x16xf32>
    %117 = arith.addf %116, %115 : vector<8x16xf32>
    %118 = arith.divf %116, %117 : vector<8x16xf32>
    %119 = vector.extract_strided_slice %112 {offsets = [0, 16], sizes = [8, 16], strides = [1, 1]} : vector<8x64xf32> to vector<8x16xf32>
    %120 = arith.negf %119 : vector<8x16xf32>
    %121 = math.exp %120 : vector<8x16xf32>
    %cst_47 = arith.constant 1.000000e+00 : f32
    %122 = vector.broadcast %cst_47 : f32 to vector<8x16xf32>
    %123 = arith.addf %122, %121 : vector<8x16xf32>
    %124 = arith.divf %122, %123 : vector<8x16xf32>
    %125 = vector.extract_strided_slice %112 {offsets = [0, 32], sizes = [8, 16], strides = [1, 1]} : vector<8x64xf32> to vector<8x16xf32>
    %126 = math.tanh %125 : vector<8x16xf32>
    %127 = vector.extract_strided_slice %112 {offsets = [0, 48], sizes = [8, 16], strides = [1, 1]} : vector<8x64xf32> to vector<8x16xf32>
    %128 = arith.negf %127 : vector<8x16xf32>
    %129 = math.exp %128 : vector<8x16xf32>
    %cst_48 = arith.constant 1.000000e+00 : f32
    %130 = vector.broadcast %cst_48 : f32 to vector<8x16xf32>
    %131 = arith.addf %130, %129 : vector<8x16xf32>
    %132 = arith.divf %130, %131 : vector<8x16xf32>
    %133 = arith.mulf %124, %93 : vector<8x16xf32>
    %134 = arith.mulf %118, %126 : vector<8x16xf32>
    %135 = arith.addf %133, %134 : vector<8x16xf32>
    %136 = math.tanh %135 : vector<8x16xf32>
    %137 = arith.mulf %132, %136 : vector<8x16xf32>
    %138 = vector.extract_strided_slice %137 {offsets = [0, 0], sizes = [4, 16], strides = [1, 1]} : vector<8x16xf32> to vector<4x16xf32>
    %c1_i32_49 = arith.constant 1 : i32
    %139 = arith.addi %c2_i32, %c1_i32_49 : i32
    %140 = arith.index_cast %139 : i32 to index
    %c0_50 = arith.constant 0 : index
    %c0_51 = arith.constant 0 : index
    %141 = vector.load %arg11[%140, %c0_50, %c0_51] : memref<9x4x16xf32, #tpu.memory_space<vmem>>, vector<1x4x16xf32>
    %142 = vector.shape_cast %141 : vector<1x4x16xf32> to vector<4x16xf32>
    %143 = vector.shape_cast %138 : vector<4x16xf32> to vector<1x4x16xf32>
    tpu.vector_store %arg11[%140, %c0_50, %c0_51], %143 {strides = array<i32>} : memref<9x4x16xf32, #tpu.memory_space<vmem>>, vector<1x4x16xf32>,
    %144 = vector.extract_strided_slice %137 {offsets = [4, 0], sizes = [4, 16], strides = [1, 1]} : vector<8x16xf32> to vector<4x16xf32>
    %c7_i32_52 = arith.constant 7 : i32
    %145 = arith.subi %c7_i32_52, %c2_i32 : i32
    %146 = arith.index_cast %145 : i32 to index
    %c0_53 = arith.constant 0 : index
    %c0_54 = arith.constant 0 : index
    %147 = vector.load %arg12[%146, %c0_53, %c0_54] : memref<9x4x16xf32, #tpu.memory_space<vmem>>, vector<1x4x16xf32>
    %148 = vector.shape_cast %147 : vector<1x4x16xf32> to vector<4x16xf32>
    %149 = vector.shape_cast %144 : vector<4x16xf32> to vector<1x4x16xf32>
    tpu.vector_store %arg12[%146, %c0_53, %c0_54], %149 {strides = array<i32>} : memref<9x4x16xf32, #tpu.memory_space<vmem>>, vector<1x4x16xf32>,
    %c3_i32 = arith.constant 3 : i32
    %150 = arith.index_cast %c3_i32 : i32 to index
    %c0_55 = arith.constant 0 : index
    %c0_56 = arith.constant 0 : index
    %151 = vector.load %arg10[%150, %c0_55, %c0_56] : memref<8x8x64xf32, #tpu.memory_space<vmem>>, vector<1x8x64xf32>
    %152 = vector.shape_cast %151 : vector<1x8x64xf32> to vector<8x64xf32>
    %cst_57 = arith.constant dense<0.000000e+00> : vector<8x64xf32>
    %153 = tpu.matmul %137, %23, %cst_57 {dimension_numbers = #tpu.dot_dimension_numbers<[1], [0], [0], [1], [0, 0, 1, 1], [], []>} : vector<8x16xf32>, vector<16x64xf32>, vector<8x64xf32> -> vector<8x64xf32>
    %154 = arith.addf %152, %153 : vector<8x64xf32>
    %155 = vector.extract_strided_slice %154 {offsets = [0, 0], sizes = [8, 16], strides = [1, 1]} : vector<8x64xf32> to vector<8x16xf32>
    %156 = arith.negf %155 : vector<8x16xf32>
    %157 = math.exp %156 : vector<8x16xf32>
    %cst_58 = arith.constant 1.000000e+00 : f32
    %158 = vector.broadcast %cst_58 : f32 to vector<8x16xf32>
    %159 = arith.addf %158, %157 : vector<8x16xf32>
    %160 = arith.divf %158, %159 : vector<8x16xf32>
    %161 = vector.extract_strided_slice %154 {offsets = [0, 16], sizes = [8, 16], strides = [1, 1]} : vector<8x64xf32> to vector<8x16xf32>
    %162 = arith.negf %161 : vector<8x16xf32>
    %163 = math.exp %162 : vector<8x16xf32>
    %cst_59 = arith.constant 1.000000e+00 : f32
    %164 = vector.broadcast %cst_59 : f32 to vector<8x16xf32>
    %165 = arith.addf %164, %163 : vector<8x16xf32>
    %166 = arith.divf %164, %165 : vector<8x16xf32>
    %167 = vector.extract_strided_slice %154 {offsets = [0, 32], sizes = [8, 16], strides = [1, 1]} : vector<8x64xf32> to vector<8x16xf32>
    %168 = math.tanh %167 : vector<8x16xf32>
    %169 = vector.extract_strided_slice %154 {offsets = [0, 48], sizes = [8, 16], strides = [1, 1]} : vector<8x64xf32> to vector<8x16xf32>
    %170 = arith.negf %169 : vector<8x16xf32>
    %171 = math.exp %170 : vector<8x16xf32>
    %cst_60 = arith.constant 1.000000e+00 : f32
    %172 = vector.broadcast %cst_60 : f32 to vector<8x16xf32>
    %173 = arith.addf %172, %171 : vector<8x16xf32>
    %174 = arith.divf %172, %173 : vector<8x16xf32>
    %175 = arith.mulf %166, %135 : vector<8x16xf32>
    %176 = arith.mulf %160, %168 : vector<8x16xf32>
    %177 = arith.addf %175, %176 : vector<8x16xf32>
    %178 = math.tanh %177 : vector<8x16xf32>
    %179 = arith.mulf %174, %178 : vector<8x16xf32>
    %180 = vector.extract_strided_slice %179 {offsets = [0, 0], sizes = [4, 16], strides = [1, 1]} : vector<8x16xf32> to vector<4x16xf32>
    %c1_i32_61 = arith.constant 1 : i32
    %181 = arith.addi %c3_i32, %c1_i32_61 : i32
    %182 = arith.index_cast %181 : i32 to index
    %c0_62 = arith.constant 0 : index
    %c0_63 = arith.constant 0 : index
    %183 = vector.load %arg11[%182, %c0_62, %c0_63] : memref<9x4x16xf32, #tpu.memory_space<vmem>>, vector<1x4x16xf32>
    %184 = vector.shape_cast %183 : vector<1x4x16xf32> to vector<4x16xf32>
    %185 = vector.shape_cast %180 : vector<4x16xf32> to vector<1x4x16xf32>
    tpu.vector_store %arg11[%182, %c0_62, %c0_63], %185 {strides = array<i32>} : memref<9x4x16xf32, #tpu.memory_space<vmem>>, vector<1x4x16xf32>,
    %186 = vector.extract_strided_slice %179 {offsets = [4, 0], sizes = [4, 16], strides = [1, 1]} : vector<8x16xf32> to vector<4x16xf32>
    %c7_i32_64 = arith.constant 7 : i32
    %187 = arith.subi %c7_i32_64, %c3_i32 : i32
    %188 = arith.index_cast %187 : i32 to index
    %c0_65 = arith.constant 0 : index
    %c0_66 = arith.constant 0 : index
    %189 = vector.load %arg12[%188, %c0_65, %c0_66] : memref<9x4x16xf32, #tpu.memory_space<vmem>>, vector<1x4x16xf32>
    %190 = vector.shape_cast %189 : vector<1x4x16xf32> to vector<4x16xf32>
    %191 = vector.shape_cast %186 : vector<4x16xf32> to vector<1x4x16xf32>
    tpu.vector_store %arg12[%188, %c0_65, %c0_66], %191 {strides = array<i32>} : memref<9x4x16xf32, #tpu.memory_space<vmem>>, vector<1x4x16xf32>,
    %c4_i32 = arith.constant 4 : i32
    %192 = arith.index_cast %c4_i32 : i32 to index
    %c0_67 = arith.constant 0 : index
    %c0_68 = arith.constant 0 : index
    %193 = vector.load %arg10[%192, %c0_67, %c0_68] : memref<8x8x64xf32, #tpu.memory_space<vmem>>, vector<1x8x64xf32>
    %194 = vector.shape_cast %193 : vector<1x8x64xf32> to vector<8x64xf32>
    %cst_69 = arith.constant dense<0.000000e+00> : vector<8x64xf32>
    %195 = tpu.matmul %179, %23, %cst_69 {dimension_numbers = #tpu.dot_dimension_numbers<[1], [0], [0], [1], [0, 0, 1, 1], [], []>} : vector<8x16xf32>, vector<16x64xf32>, vector<8x64xf32> -> vector<8x64xf32>
    %196 = arith.addf %194, %195 : vector<8x64xf32>
    %197 = vector.extract_strided_slice %196 {offsets = [0, 0], sizes = [8, 16], strides = [1, 1]} : vector<8x64xf32> to vector<8x16xf32>
    %198 = arith.negf %197 : vector<8x16xf32>
    %199 = math.exp %198 : vector<8x16xf32>
    %cst_70 = arith.constant 1.000000e+00 : f32
    %200 = vector.broadcast %cst_70 : f32 to vector<8x16xf32>
    %201 = arith.addf %200, %199 : vector<8x16xf32>
    %202 = arith.divf %200, %201 : vector<8x16xf32>
    %203 = vector.extract_strided_slice %196 {offsets = [0, 16], sizes = [8, 16], strides = [1, 1]} : vector<8x64xf32> to vector<8x16xf32>
    %204 = arith.negf %203 : vector<8x16xf32>
    %205 = math.exp %204 : vector<8x16xf32>
    %cst_71 = arith.constant 1.000000e+00 : f32
    %206 = vector.broadcast %cst_71 : f32 to vector<8x16xf32>
    %207 = arith.addf %206, %205 : vector<8x16xf32>
    %208 = arith.divf %206, %207 : vector<8x16xf32>
    %209 = vector.extract_strided_slice %196 {offsets = [0, 32], sizes = [8, 16], strides = [1, 1]} : vector<8x64xf32> to vector<8x16xf32>
    %210 = math.tanh %209 : vector<8x16xf32>
    %211 = vector.extract_strided_slice %196 {offsets = [0, 48], sizes = [8, 16], strides = [1, 1]} : vector<8x64xf32> to vector<8x16xf32>
    %212 = arith.negf %211 : vector<8x16xf32>
    %213 = math.exp %212 : vector<8x16xf32>
    %cst_72 = arith.constant 1.000000e+00 : f32
    %214 = vector.broadcast %cst_72 : f32 to vector<8x16xf32>
    %215 = arith.addf %214, %213 : vector<8x16xf32>
    %216 = arith.divf %214, %215 : vector<8x16xf32>
    %217 = arith.mulf %208, %177 : vector<8x16xf32>
    %218 = arith.mulf %202, %210 : vector<8x16xf32>
    %219 = arith.addf %217, %218 : vector<8x16xf32>
    %220 = math.tanh %219 : vector<8x16xf32>
    %221 = arith.mulf %216, %220 : vector<8x16xf32>
    %222 = vector.extract_strided_slice %221 {offsets = [0, 0], sizes = [4, 16], strides = [1, 1]} : vector<8x16xf32> to vector<4x16xf32>
    %c1_i32_73 = arith.constant 1 : i32
    %223 = arith.addi %c4_i32, %c1_i32_73 : i32
    %224 = arith.index_cast %223 : i32 to index
    %c0_74 = arith.constant 0 : index
    %c0_75 = arith.constant 0 : index
    %225 = vector.load %arg11[%224, %c0_74, %c0_75] : memref<9x4x16xf32, #tpu.memory_space<vmem>>, vector<1x4x16xf32>
    %226 = vector.shape_cast %225 : vector<1x4x16xf32> to vector<4x16xf32>
    %227 = vector.shape_cast %222 : vector<4x16xf32> to vector<1x4x16xf32>
    tpu.vector_store %arg11[%224, %c0_74, %c0_75], %227 {strides = array<i32>} : memref<9x4x16xf32, #tpu.memory_space<vmem>>, vector<1x4x16xf32>,
    %228 = vector.extract_strided_slice %221 {offsets = [4, 0], sizes = [4, 16], strides = [1, 1]} : vector<8x16xf32> to vector<4x16xf32>
    %c7_i32_76 = arith.constant 7 : i32
    %229 = arith.subi %c7_i32_76, %c4_i32 : i32
    %230 = arith.index_cast %229 : i32 to index
    %c0_77 = arith.constant 0 : index
    %c0_78 = arith.constant 0 : index
    %231 = vector.load %arg12[%230, %c0_77, %c0_78] : memref<9x4x16xf32, #tpu.memory_space<vmem>>, vector<1x4x16xf32>
    %232 = vector.shape_cast %231 : vector<1x4x16xf32> to vector<4x16xf32>
    %233 = vector.shape_cast %228 : vector<4x16xf32> to vector<1x4x16xf32>
    tpu.vector_store %arg12[%230, %c0_77, %c0_78], %233 {strides = array<i32>} : memref<9x4x16xf32, #tpu.memory_space<vmem>>, vector<1x4x16xf32>,
    %c5_i32 = arith.constant 5 : i32
    %234 = arith.index_cast %c5_i32 : i32 to index
    %c0_79 = arith.constant 0 : index
    %c0_80 = arith.constant 0 : index
    %235 = vector.load %arg10[%234, %c0_79, %c0_80] : memref<8x8x64xf32, #tpu.memory_space<vmem>>, vector<1x8x64xf32>
    %236 = vector.shape_cast %235 : vector<1x8x64xf32> to vector<8x64xf32>
    %cst_81 = arith.constant dense<0.000000e+00> : vector<8x64xf32>
    %237 = tpu.matmul %221, %23, %cst_81 {dimension_numbers = #tpu.dot_dimension_numbers<[1], [0], [0], [1], [0, 0, 1, 1], [], []>} : vector<8x16xf32>, vector<16x64xf32>, vector<8x64xf32> -> vector<8x64xf32>
    %238 = arith.addf %236, %237 : vector<8x64xf32>
    %239 = vector.extract_strided_slice %238 {offsets = [0, 0], sizes = [8, 16], strides = [1, 1]} : vector<8x64xf32> to vector<8x16xf32>
    %240 = arith.negf %239 : vector<8x16xf32>
    %241 = math.exp %240 : vector<8x16xf32>
    %cst_82 = arith.constant 1.000000e+00 : f32
    %242 = vector.broadcast %cst_82 : f32 to vector<8x16xf32>
    %243 = arith.addf %242, %241 : vector<8x16xf32>
    %244 = arith.divf %242, %243 : vector<8x16xf32>
    %245 = vector.extract_strided_slice %238 {offsets = [0, 16], sizes = [8, 16], strides = [1, 1]} : vector<8x64xf32> to vector<8x16xf32>
    %246 = arith.negf %245 : vector<8x16xf32>
    %247 = math.exp %246 : vector<8x16xf32>
    %cst_83 = arith.constant 1.000000e+00 : f32
    %248 = vector.broadcast %cst_83 : f32 to vector<8x16xf32>
    %249 = arith.addf %248, %247 : vector<8x16xf32>
    %250 = arith.divf %248, %249 : vector<8x16xf32>
    %251 = vector.extract_strided_slice %238 {offsets = [0, 32], sizes = [8, 16], strides = [1, 1]} : vector<8x64xf32> to vector<8x16xf32>
    %252 = math.tanh %251 : vector<8x16xf32>
    %253 = vector.extract_strided_slice %238 {offsets = [0, 48], sizes = [8, 16], strides = [1, 1]} : vector<8x64xf32> to vector<8x16xf32>
    %254 = arith.negf %253 : vector<8x16xf32>
    %255 = math.exp %254 : vector<8x16xf32>
    %cst_84 = arith.constant 1.000000e+00 : f32
    %256 = vector.broadcast %cst_84 : f32 to vector<8x16xf32>
    %257 = arith.addf %256, %255 : vector<8x16xf32>
    %258 = arith.divf %256, %257 : vector<8x16xf32>
    %259 = arith.mulf %250, %219 : vector<8x16xf32>
    %260 = arith.mulf %244, %252 : vector<8x16xf32>
    %261 = arith.addf %259, %260 : vector<8x16xf32>
    %262 = math.tanh %261 : vector<8x16xf32>
    %263 = arith.mulf %258, %262 : vector<8x16xf32>
    %264 = vector.extract_strided_slice %263 {offsets = [0, 0], sizes = [4, 16], strides = [1, 1]} : vector<8x16xf32> to vector<4x16xf32>
    %c1_i32_85 = arith.constant 1 : i32
    %265 = arith.addi %c5_i32, %c1_i32_85 : i32
    %266 = arith.index_cast %265 : i32 to index
    %c0_86 = arith.constant 0 : index
    %c0_87 = arith.constant 0 : index
    %267 = vector.load %arg11[%266, %c0_86, %c0_87] : memref<9x4x16xf32, #tpu.memory_space<vmem>>, vector<1x4x16xf32>
    %268 = vector.shape_cast %267 : vector<1x4x16xf32> to vector<4x16xf32>
    %269 = vector.shape_cast %264 : vector<4x16xf32> to vector<1x4x16xf32>
    tpu.vector_store %arg11[%266, %c0_86, %c0_87], %269 {strides = array<i32>} : memref<9x4x16xf32, #tpu.memory_space<vmem>>, vector<1x4x16xf32>,
    %270 = vector.extract_strided_slice %263 {offsets = [4, 0], sizes = [4, 16], strides = [1, 1]} : vector<8x16xf32> to vector<4x16xf32>
    %c7_i32_88 = arith.constant 7 : i32
    %271 = arith.subi %c7_i32_88, %c5_i32 : i32
    %272 = arith.index_cast %271 : i32 to index
    %c0_89 = arith.constant 0 : index
    %c0_90 = arith.constant 0 : index
    %273 = vector.load %arg12[%272, %c0_89, %c0_90] : memref<9x4x16xf32, #tpu.memory_space<vmem>>, vector<1x4x16xf32>
    %274 = vector.shape_cast %273 : vector<1x4x16xf32> to vector<4x16xf32>
    %275 = vector.shape_cast %270 : vector<4x16xf32> to vector<1x4x16xf32>
    tpu.vector_store %arg12[%272, %c0_89, %c0_90], %275 {strides = array<i32>} : memref<9x4x16xf32, #tpu.memory_space<vmem>>, vector<1x4x16xf32>,
    %c6_i32 = arith.constant 6 : i32
    %276 = arith.index_cast %c6_i32 : i32 to index
    %c0_91 = arith.constant 0 : index
    %c0_92 = arith.constant 0 : index
    %277 = vector.load %arg10[%276, %c0_91, %c0_92] : memref<8x8x64xf32, #tpu.memory_space<vmem>>, vector<1x8x64xf32>
    %278 = vector.shape_cast %277 : vector<1x8x64xf32> to vector<8x64xf32>
    %cst_93 = arith.constant dense<0.000000e+00> : vector<8x64xf32>
    %279 = tpu.matmul %263, %23, %cst_93 {dimension_numbers = #tpu.dot_dimension_numbers<[1], [0], [0], [1], [0, 0, 1, 1], [], []>} : vector<8x16xf32>, vector<16x64xf32>, vector<8x64xf32> -> vector<8x64xf32>
    %280 = arith.addf %278, %279 : vector<8x64xf32>
    %281 = vector.extract_strided_slice %280 {offsets = [0, 0], sizes = [8, 16], strides = [1, 1]} : vector<8x64xf32> to vector<8x16xf32>
    %282 = arith.negf %281 : vector<8x16xf32>
    %283 = math.exp %282 : vector<8x16xf32>
    %cst_94 = arith.constant 1.000000e+00 : f32
    %284 = vector.broadcast %cst_94 : f32 to vector<8x16xf32>
    %285 = arith.addf %284, %283 : vector<8x16xf32>
    %286 = arith.divf %284, %285 : vector<8x16xf32>
    %287 = vector.extract_strided_slice %280 {offsets = [0, 16], sizes = [8, 16], strides = [1, 1]} : vector<8x64xf32> to vector<8x16xf32>
    %288 = arith.negf %287 : vector<8x16xf32>
    %289 = math.exp %288 : vector<8x16xf32>
    %cst_95 = arith.constant 1.000000e+00 : f32
    %290 = vector.broadcast %cst_95 : f32 to vector<8x16xf32>
    %291 = arith.addf %290, %289 : vector<8x16xf32>
    %292 = arith.divf %290, %291 : vector<8x16xf32>
    %293 = vector.extract_strided_slice %280 {offsets = [0, 32], sizes = [8, 16], strides = [1, 1]} : vector<8x64xf32> to vector<8x16xf32>
    %294 = math.tanh %293 : vector<8x16xf32>
    %295 = vector.extract_strided_slice %280 {offsets = [0, 48], sizes = [8, 16], strides = [1, 1]} : vector<8x64xf32> to vector<8x16xf32>
    %296 = arith.negf %295 : vector<8x16xf32>
    %297 = math.exp %296 : vector<8x16xf32>
    %cst_96 = arith.constant 1.000000e+00 : f32
    %298 = vector.broadcast %cst_96 : f32 to vector<8x16xf32>
    %299 = arith.addf %298, %297 : vector<8x16xf32>
    %300 = arith.divf %298, %299 : vector<8x16xf32>
    %301 = arith.mulf %292, %261 : vector<8x16xf32>
    %302 = arith.mulf %286, %294 : vector<8x16xf32>
    %303 = arith.addf %301, %302 : vector<8x16xf32>
    %304 = math.tanh %303 : vector<8x16xf32>
    %305 = arith.mulf %300, %304 : vector<8x16xf32>
    %306 = vector.extract_strided_slice %305 {offsets = [0, 0], sizes = [4, 16], strides = [1, 1]} : vector<8x16xf32> to vector<4x16xf32>
    %c1_i32_97 = arith.constant 1 : i32
    %307 = arith.addi %c6_i32, %c1_i32_97 : i32
    %308 = arith.index_cast %307 : i32 to index
    %c0_98 = arith.constant 0 : index
    %c0_99 = arith.constant 0 : index
    %309 = vector.load %arg11[%308, %c0_98, %c0_99] : memref<9x4x16xf32, #tpu.memory_space<vmem>>, vector<1x4x16xf32>
    %310 = vector.shape_cast %309 : vector<1x4x16xf32> to vector<4x16xf32>
    %311 = vector.shape_cast %306 : vector<4x16xf32> to vector<1x4x16xf32>
    tpu.vector_store %arg11[%308, %c0_98, %c0_99], %311 {strides = array<i32>} : memref<9x4x16xf32, #tpu.memory_space<vmem>>, vector<1x4x16xf32>,
    %312 = vector.extract_strided_slice %305 {offsets = [4, 0], sizes = [4, 16], strides = [1, 1]} : vector<8x16xf32> to vector<4x16xf32>
    %c7_i32_100 = arith.constant 7 : i32
    %313 = arith.subi %c7_i32_100, %c6_i32 : i32
    %314 = arith.index_cast %313 : i32 to index
    %c0_101 = arith.constant 0 : index
    %c0_102 = arith.constant 0 : index
    %315 = vector.load %arg12[%314, %c0_101, %c0_102] : memref<9x4x16xf32, #tpu.memory_space<vmem>>, vector<1x4x16xf32>
    %316 = vector.shape_cast %315 : vector<1x4x16xf32> to vector<4x16xf32>
    %317 = vector.shape_cast %312 : vector<4x16xf32> to vector<1x4x16xf32>
    tpu.vector_store %arg12[%314, %c0_101, %c0_102], %317 {strides = array<i32>} : memref<9x4x16xf32, #tpu.memory_space<vmem>>, vector<1x4x16xf32>,
    %c7_i32_103 = arith.constant 7 : i32
    %318 = arith.index_cast %c7_i32_103 : i32 to index
    %c0_104 = arith.constant 0 : index
    %c0_105 = arith.constant 0 : index
    %319 = vector.load %arg10[%318, %c0_104, %c0_105] : memref<8x8x64xf32, #tpu.memory_space<vmem>>, vector<1x8x64xf32>
    %320 = vector.shape_cast %319 : vector<1x8x64xf32> to vector<8x64xf32>
    %cst_106 = arith.constant dense<0.000000e+00> : vector<8x64xf32>
    %321 = tpu.matmul %305, %23, %cst_106 {dimension_numbers = #tpu.dot_dimension_numbers<[1], [0], [0], [1], [0, 0, 1, 1], [], []>} : vector<8x16xf32>, vector<16x64xf32>, vector<8x64xf32> -> vector<8x64xf32>
    %322 = arith.addf %320, %321 : vector<8x64xf32>
    %323 = vector.extract_strided_slice %322 {offsets = [0, 0], sizes = [8, 16], strides = [1, 1]} : vector<8x64xf32> to vector<8x16xf32>
    %324 = arith.negf %323 : vector<8x16xf32>
    %325 = math.exp %324 : vector<8x16xf32>
    %cst_107 = arith.constant 1.000000e+00 : f32
    %326 = vector.broadcast %cst_107 : f32 to vector<8x16xf32>
    %327 = arith.addf %326, %325 : vector<8x16xf32>
    %328 = arith.divf %326, %327 : vector<8x16xf32>
    %329 = vector.extract_strided_slice %322 {offsets = [0, 16], sizes = [8, 16], strides = [1, 1]} : vector<8x64xf32> to vector<8x16xf32>
    %330 = arith.negf %329 : vector<8x16xf32>
    %331 = math.exp %330 : vector<8x16xf32>
    %cst_108 = arith.constant 1.000000e+00 : f32
    %332 = vector.broadcast %cst_108 : f32 to vector<8x16xf32>
    %333 = arith.addf %332, %331 : vector<8x16xf32>
    %334 = arith.divf %332, %333 : vector<8x16xf32>
    %335 = vector.extract_strided_slice %322 {offsets = [0, 32], sizes = [8, 16], strides = [1, 1]} : vector<8x64xf32> to vector<8x16xf32>
    %336 = math.tanh %335 : vector<8x16xf32>
    %337 = vector.extract_strided_slice %322 {offsets = [0, 48], sizes = [8, 16], strides = [1, 1]} : vector<8x64xf32> to vector<8x16xf32>
    %338 = arith.negf %337 : vector<8x16xf32>
    %339 = math.exp %338 : vector<8x16xf32>
    %cst_109 = arith.constant 1.000000e+00 : f32
    %340 = vector.broadcast %cst_109 : f32 to vector<8x16xf32>
    %341 = arith.addf %340, %339 : vector<8x16xf32>
    %342 = arith.divf %340, %341 : vector<8x16xf32>
    %343 = arith.mulf %334, %303 : vector<8x16xf32>
    %344 = arith.mulf %328, %336 : vector<8x16xf32>
    %345 = arith.addf %343, %344 : vector<8x16xf32>
    %346 = math.tanh %345 : vector<8x16xf32>
    %347 = arith.mulf %342, %346 : vector<8x16xf32>
    %348 = vector.extract_strided_slice %347 {offsets = [0, 0], sizes = [4, 16], strides = [1, 1]} : vector<8x16xf32> to vector<4x16xf32>
    %c1_i32_110 = arith.constant 1 : i32
    %349 = arith.addi %c7_i32_103, %c1_i32_110 : i32
    %350 = arith.index_cast %349 : i32 to index
    %c0_111 = arith.constant 0 : index
    %c0_112 = arith.constant 0 : index
    %351 = vector.load %arg11[%350, %c0_111, %c0_112] : memref<9x4x16xf32, #tpu.memory_space<vmem>>, vector<1x4x16xf32>
    %352 = vector.shape_cast %351 : vector<1x4x16xf32> to vector<4x16xf32>
    %353 = vector.shape_cast %348 : vector<4x16xf32> to vector<1x4x16xf32>
    tpu.vector_store %arg11[%350, %c0_111, %c0_112], %353 {strides = array<i32>} : memref<9x4x16xf32, #tpu.memory_space<vmem>>, vector<1x4x16xf32>,
    %354 = vector.extract_strided_slice %347 {offsets = [4, 0], sizes = [4, 16], strides = [1, 1]} : vector<8x16xf32> to vector<4x16xf32>
    %c7_i32_113 = arith.constant 7 : i32
    %355 = arith.subi %c7_i32_113, %c7_i32_103 : i32
    %356 = arith.index_cast %355 : i32 to index
    %c0_114 = arith.constant 0 : index
    %c0_115 = arith.constant 0 : index
    %357 = vector.load %arg12[%356, %c0_114, %c0_115] : memref<9x4x16xf32, #tpu.memory_space<vmem>>, vector<1x4x16xf32>
    %358 = vector.shape_cast %357 : vector<1x4x16xf32> to vector<4x16xf32>
    %359 = vector.shape_cast %354 : vector<4x16xf32> to vector<1x4x16xf32>
    tpu.vector_store %arg12[%356, %c0_114, %c0_115], %359 {strides = array<i32>} : memref<9x4x16xf32, #tpu.memory_space<vmem>>, vector<1x4x16xf32>,
    %c8_i32 = arith.constant 8 : i32
    %c0_116 = arith.constant 0 : index
    %c0_117 = arith.constant 0 : index
    %c0_118 = arith.constant 0 : index
    %360 = vector.load %arg11[%c0_116, %c0_117, %c0_118] : memref<9x4x16xf32, #tpu.memory_space<vmem>>, vector<8x4x16xf32>
    %361 = vector.shape_cast %360 : vector<8x4x16xf32> to vector<32x16xf32>
    %c1 = arith.constant 1 : index
    %c0_119 = arith.constant 0 : index
    %c0_120 = arith.constant 0 : index
    %362 = vector.load %arg12[%c1, %c0_119, %c0_120] : memref<9x4x16xf32, #tpu.memory_space<vmem>>, vector<8x4x16xf32>
    %363 = vector.shape_cast %362 : vector<8x4x16xf32> to vector<32x16xf32>
    %c0_121 = arith.constant 0 : index
    %c0_122 = arith.constant 0 : index
    %364 = vector.load %arg4[%c0_121, %c0_122] : memref<16x128xf32, #tpu.memory_space<vmem>>, vector<16x128xf32>
    %cst_123 = arith.constant dense<0.000000e+00> : vector<32x128xf32>
    %365 = tpu.matmul %361, %364, %cst_123 {dimension_numbers = #tpu.dot_dimension_numbers<[1], [0], [0], [1], [0, 0, 1, 1], [], []>} : vector<32x16xf32>, vector<16x128xf32>, vector<32x128xf32> -> vector<32x128xf32>
    %c0_124 = arith.constant 0 : index
    %c0_125 = arith.constant 0 : index
    %366 = vector.load %arg5[%c0_124, %c0_125] : memref<16x128xf32, #tpu.memory_space<vmem>>, vector<16x128xf32>
    %cst_126 = arith.constant dense<0.000000e+00> : vector<32x128xf32>
    %367 = tpu.matmul %363, %366, %cst_126 {dimension_numbers = #tpu.dot_dimension_numbers<[1], [0], [0], [1], [0, 0, 1, 1], [], []>} : vector<32x16xf32>, vector<16x128xf32>, vector<32x128xf32> -> vector<32x128xf32>
    %368 = arith.addf %365, %367 : vector<32x128xf32>
    %c0_127 = arith.constant 0 : index
    %c0_128 = arith.constant 0 : index
    %369 = vector.load %arg6[%c0_127, %c0_128] : memref<1x128xf32, #tpu.memory_space<vmem>>, vector<1x128xf32>
    %370 = vector.broadcast %369 : vector<1x128xf32> to vector<32x128xf32>
    %371 = arith.addf %368, %370 : vector<32x128xf32>
    %cst_129 = arith.constant dense<0xFF800000> : vector<32xf32>
    %372 = vector.multi_reduction <maximumf>, %371, %cst_129 [1] : vector<32x128xf32> to vector<32xf32>
    %373 = vector.shape_cast %372 : vector<32xf32> to vector<32x1xf32>
    %374 = vector.broadcast %373 : vector<32x1xf32> to vector<32x128xf32>
    %375 = arith.subf %371, %374 : vector<32x128xf32>
    %376 = math.exp %375 : vector<32x128xf32>
    %cst_130 = arith.constant dense<0.000000e+00> : vector<32xf32>
    %377 = vector.multi_reduction <add>, %376, %cst_130 [1] : vector<32x128xf32> to vector<32xf32>
    %378 = vector.shape_cast %377 : vector<32xf32> to vector<32x1xf32>
    %379 = math.log %378 : vector<32x1xf32>
    %380 = vector.broadcast %379 : vector<32x1xf32> to vector<32x128xf32>
    %381 = arith.subf %375, %380 : vector<32x128xf32>
    %c0_131 = arith.constant 0 : index
    %c0_132 = arith.constant 0 : index
    %382 = vector.load %arg9[%c0_131, %c0_132] : memref<32x128xf32, #tpu.memory_space<vmem>>, vector<32x128xf32>
    tpu.vector_store %arg9[%c0_131, %c0_132], %381 {strides = array<i32>} : memref<32x128xf32, #tpu.memory_space<vmem>>, vector<32x128xf32>,
    return
  }
}

</mosaic_0001>

<llo_original>
// kernel: tpu_custom_call.1
$region0: #{tpu_custom_call.1}
  #allocation0 [shape = 'u32[]', space=smem, size = 0x4, offset = 0x4, fixed_abs, tag = 'smem constant byte address 0x4 - core index']
  #allocation1 [shape = 'u32[144,128]{1,0:T(1,128)}', space=vmem, size = 0x12000, scoped, tag = 'internal scratch']
  #allocation2 [shape = 'f32[8,8,64]{2,1,0:T(8,128)}', space=vmem, size = 0x8000, scoped, tag = 'scratch operand']
  #allocation3 [shape = 'f32[9,4,16]{2,1,0:T(4,128)}', space=vmem, size = 0x4800, scoped, tag = 'scratch operand']
  #allocation4 [shape = 'f32[9,4,16]{2,1,0:T(4,128)}', space=vmem, size = 0x4800, scoped, tag = 'scratch operand']
  %s0 = inlined_call_operand.hbm [shape: f32[8,8,32], index: 0, kind: input, shape index: {}]
  %s1 = inlined_call_operand.hbm [shape: f32[32,64], index: 1, kind: input, shape index: {}]
  %s2 = inlined_call_operand.hbm [shape: f32[16,64], index: 2, kind: input, shape index: {}]
  %s3 = inlined_call_operand.vmem [shape: f32[1,64], index: 3, kind: input, shape index: {}]
  %s4 = inlined_call_operand.hbm [shape: f32[16,128], index: 4, kind: input, shape index: {}]
  %s5 = inlined_call_operand.hbm [shape: f32[16,128], index: 5, kind: input, shape index: {}]
  %s6 = inlined_call_operand.vmem [shape: f32[1,128], index: 6, kind: input, shape index: {}]
  %s7 = inlined_call_operand.vmem [shape: f32[1,16], index: 7, kind: input, shape index: {}]
  %s8 = inlined_call_operand.vmem [shape: f32[1,16], index: 8, kind: input, shape index: {}]
  %s9 = inlined_call_operand.hbm [shape: f32[32,128], index: 9, kind: output, shape index: {}]
  %s10 = sld [smem:[#allocation0]]
  $region66: #{tpu_custom_call.1} parent=0
    _
  %s12 = ssub.s32 1, %s10
  %s13 = scalar_select 0, %s12, %s10
  $region1: #{tpu_custom_call.1} parent=0
    #allocation5 [shape = 'u8[32768]{0}', space=vmem, size = 0x8000, scoped, tag = 'input window, operand 0, single buffered']
    #allocation6 [shape = 's32[1]{0}', space=sflag, size = 0x4, scoped, tag = 'scoped memory for tpu_custom_call.1']
    #allocation7 [shape = 's32[1]{0}', space=sflag, size = 0x4, scoped, tag = 'scoped memory for tpu_custom_call.1']
    #allocation8 [shape = 'u8[16384]{0}', space=vmem, size = 0x4000, scoped, tag = 'input window, operand 1, single buffered']
    #allocation9 [shape = 's32[1]{0}', space=sflag, size = 0x4, scoped, tag = 'scoped memory for tpu_custom_call.1']
    #allocation10 [shape = 'u8[8192]{0}', space=vmem, size = 0x2000, scoped, tag = 'input window, operand 2, single buffered']
    #allocation11 [shape = 'u8[8192]{0}', space=vmem, size = 0x2000, scoped, tag = 'input window, operand 4, single buffered']
    #allocation12 [shape = 's32[1]{0}', space=sflag, size = 0x4, scoped, tag = 'scoped memory for tpu_custom_call.1']
    #allocation13 [shape = 'u8[8192]{0}', space=vmem, size = 0x2000, scoped, tag = 'input window, operand 5, single buffered']
    #allocation14 [shape = 'u8[16384]{0}', space=vmem, size = 0x4000, scoped, tag = 'output window, operand 0, single buffered']
    %14 = vsyncpa [#allocation6], 0
    %15 = vsyncpa [#allocation9], 0
    %16 = vsyncpa [#allocation12], 0
    %17 = vsyncpa [#allocation7], 0
    // Predicated region
    $region2: #{tpu_custom_call.1} parent=1 // pred_check
      _
    $region3: #{tpu_custom_call.1} parent=1 // pred_check_branch
      %19 = sbr.rel (0) target = $region5
    $region4: #{tpu_custom_call.1} parent=1 // pred_region
      %s21 = ssub.s32 1024, 1024
      %22 = vsyncadd [#allocation6], %s21
      %s23 = sshll.u32 [#allocation5], 4
      %s24 = int_to_ptr.vmem [resolvable:$true] %s23
      %29 = dma.hbm_to_vmem [thread:$0]  %s0, 1024, %s24, [#allocation6], 128, 128, 8
    $region5: #{tpu_custom_call.1} parent=1 // pred_fallthru
      _
    // Predicated region
    $region6: #{tpu_custom_call.1} parent=1 // pred_check
      _
    $region7: #{tpu_custom_call.1} parent=1 // pred_check_branch
      %31 = sbr.rel (0) target = $region9
    $region8: #{tpu_custom_call.1} parent=1 // pred_region
      %s33 = ssub.s32 512, 512
      %34 = vsyncadd [#allocation9], %s33
      %s35 = sshll.u32 [#allocation8], 4
      %s36 = int_to_ptr.vmem [resolvable:$true] %s35
      %41 = dma.hbm_to_vmem [thread:$0]  %s1, 512, %s36, [#allocation9], 128, 128, 8
    $region9: #{tpu_custom_call.1} parent=1 // pred_fallthru
      _
    // Predicated region
    $region10: #{tpu_custom_call.1} parent=1 // pred_check
      _
    $region11: #{tpu_custom_call.1} parent=1 // pred_check_branch
      %43 = sbr.rel (0) target = $region13
    $region12: #{tpu_custom_call.1} parent=1 // pred_region
      %s45 = ssub.s32 256, 256
      %46 = vsyncadd [#allocation9], %s45
      %s47 = sshll.u32 [#allocation10], 4
      %s48 = int_to_ptr.vmem [resolvable:$true] %s47
      %53 = dma.hbm_to_vmem [thread:$0]  %s2, 256, %s48, [#allocation9], 128, 128, 8
    $region13: #{tpu_custom_call.1} parent=1 // pred_fallthru
      _
    // Predicated region
    $region14: #{tpu_custom_call.1} parent=1 // pred_check
      _
    $region15: #{tpu_custom_call.1} parent=1 // pred_check_branch
      %55 = sbr.rel (0) target = $region17
    $region16: #{tpu_custom_call.1} parent=1 // pred_region
      _
    $region17: #{tpu_custom_call.1} parent=1 // pred_fallthru
      _
    // Predicated region
    $region18: #{tpu_custom_call.1} parent=1 // pred_check
      _
    $region19: #{tpu_custom_call.1} parent=1 // pred_check_branch
      %57 = sbr.rel (0) target = $region21
    $region20: #{tpu_custom_call.1} parent=1 // pred_region
      %s59 = ssub.s32 256, 256
      %60 = vsyncadd [#allocation12], %s59
      %s61 = sshll.u32 [#allocation11], 4
      %s62 = int_to_ptr.vmem [resolvable:$true] %s61
      %67 = dma.hbm_to_vmem [thread:$0]  %s4, 256, %s62, [#allocation12], 128, 128, 8
    $region21: #{tpu_custom_call.1} parent=1 // pred_fallthru
      _
    // Predicated region
    $region22: #{tpu_custom_call.1} parent=1 // pred_check
      _
    $region23: #{tpu_custom_call.1} parent=1 // pred_check_branch
      %69 = sbr.rel (0) target = $region25
    $region24: #{tpu_custom_call.1} parent=1 // pred_region
      %s71 = ssub.s32 256, 256
      %72 = vsyncadd [#allocation12], %s71
      %s73 = sshll.u32 [#allocation13], 4
      %s74 = int_to_ptr.vmem [resolvable:$true] %s73
      %79 = dma.hbm_to_vmem [thread:$0]  %s5, 256, %s74, [#allocation12], 128, 128, 8
    $region25: #{tpu_custom_call.1} parent=1 // pred_fallthru
      _
    // Predicated region
    $region26: #{tpu_custom_call.1} parent=1 // pred_check
      _
    $region27: #{tpu_custom_call.1} parent=1 // pred_check_branch
      %81 = sbr.rel (0) target = $region29
    $region28: #{tpu_custom_call.1} parent=1 // pred_region
      _
    $region29: #{tpu_custom_call.1} parent=1 // pred_fallthru
      _
    // Predicated region
    $region30: #{tpu_custom_call.1} parent=1 // pred_check
      _
    $region31: #{tpu_custom_call.1} parent=1 // pred_check_branch
      %83 = sbr.rel (0) target = $region33
    $region32: #{tpu_custom_call.1} parent=1 // pred_region
      _
    $region33: #{tpu_custom_call.1} parent=1 // pred_fallthru
      _
    // Predicated region
    $region34: #{tpu_custom_call.1} parent=1 // pred_check
      _
    $region35: #{tpu_custom_call.1} parent=1 // pred_check_branch
      %85 = sbr.rel (0) target = $region37
    $region36: #{tpu_custom_call.1} parent=1 // pred_region
      _
    $region37: #{tpu_custom_call.1} parent=1 // pred_fallthru
      _
    // Predicated region
    $region38: #{tpu_custom_call.1} parent=1 // pred_check
      _
    $region39: #{tpu_custom_call.1} parent=1 // pred_check_branch
      %87 = sbr.rel (0) target = $region41
    $region40: #{tpu_custom_call.1} parent=1 // pred_region
      %88 = dma.done [#allocation6], 1024
    $region41: #{tpu_custom_call.1} parent=1 // pred_fallthru
      _
    // Predicated region
    $region42: #{tpu_custom_call.1} parent=1 // pred_check
      _
    $region43: #{tpu_custom_call.1} parent=1 // pred_check_branch
      %90 = sbr.rel (0) target = $region45
    $region44: #{tpu_custom_call.1} parent=1 // pred_region
      %91 = dma.done [#allocation9], 512
    $region45: #{tpu_custom_call.1} parent=1 // pred_fallthru
      _
    // Predicated region
    $region46: #{tpu_custom_call.1} parent=1 // pred_check
      _
    $region47: #{tpu_custom_call.1} parent=1 // pred_check_branch
      %93 = sbr.rel (0) target = $region49
    $region48: #{tpu_custom_call.1} parent=1 // pred_region
      %94 = dma.done [#allocation9], 256
    $region49: #{tpu_custom_call.1} parent=1 // pred_fallthru
      _
    // Predicated region
    $region50: #{tpu_custom_call.1} parent=1 // pred_check
      _
    $region51: #{tpu_custom_call.1} parent=1 // pred_check_branch
      %96 = sbr.rel (0) target = $region53
    $region52: #{tpu_custom_call.1} parent=1 // pred_region
      %97 = dma.done [#allocation12], 256
    $region53: #{tpu_custom_call.1} parent=1 // pred_fallthru
      _
    // Predicated region
    $region54: #{tpu_custom_call.1} parent=1 // pred_check
      _
    $region55: #{tpu_custom_call.1} parent=1 // pred_check_branch
      %99 = sbr.rel (0) target = $region57
    $region56: #{tpu_custom_call.1} parent=1 // pred_region
      %100 = dma.done [#allocation12], 256
    $region57: #{tpu_custom_call.1} parent=1 // pred_fallthru
      _
    %v101 = vld [vmem:[#allocation5] sm:$0xff]
    %v102 = vld [vmem:[#allocation5 + $0x8] sm:$0xff]
    %v103 = vld [vmem:[#allocation5 + $0x10] sm:$0xff]
    %v104 = vld [vmem:[#allocation5 + $0x18] sm:$0xff]
    %v105 = vld [vmem:[#allocation5 + $0x20] sm:$0xff]
    %v106 = vld [vmem:[#allocation5 + $0x28] sm:$0xff]
    %v107 = vld [vmem:[#allocation5 + $0x30] sm:$0xff]
    %v108 = vld [vmem:[#allocation5 + $0x38] sm:$0xff]
    %v109 = vld [vmem:[#allocation8] sm:$0xff]
    %v110 = vld [vmem:[#allocation8 + $0x8] sm:$0xff]
    %v111 = vld [vmem:[#allocation8 + $0x10] sm:$0xff]
    %v112 = vld [vmem:[#allocation8 + $0x18] sm:$0xff]
    %v113 = vld [vmem:[%s3] sm:$0x1]
    %v115 = vlaneseq
    %v116 = vshrl.u32 %v115, 7
    %v117 = vsub.s32 0, %v116
    %v118 = vrot.slane %v113, %v117
    %vm120 = vcmask 261120
    %v122 = vsel %vm120, %v101, 0
    %v125 = vsel %vm120, %v102, 0
    %v128 = vsel %vm120, %v103, 0
    %v131 = vsel %vm120, %v104, 0
    %v134 = vsel %vm120, %v105, 0
    %v137 = vsel %vm120, %v106, 0
    %v140 = vsel %vm120, %v107, 0
    %v143 = vsel %vm120, %v108, 0
    %145 = vmatprep.subr.mxu0 0.0
    %146 = vmatpush1.msra.mxu0 0.0
    %147 = vmatprep.subr.mxu0 0.0
    %148 = vmatpush1.msra.mxu0 0.0
    %149 = vmatprep.subr.mxu0 0.0
    %150 = vmatpush1.msra.mxu0 0.0
    %151 = vmatprep.subr.mxu0 0.0
    %152 = vmatpush1.msra.mxu0 0.0
    %153 = vmatprep.subr.mxu0 0.0
    %154 = vmatpush1.msra.mxu0 0.0
    %155 = vmatprep.subr.mxu0 0.0
    %156 = vmatpush1.msra.mxu0 0.0
    %157 = vmatprep.subr.mxu0 0.0
    %158 = vmatpush1.msra.mxu0 0.0
    %159 = vmatprep.subr.mxu0 0.0
    %160 = vmatpush1.msra.mxu0 0.0
    %161 = vmatprep.subr.mxu0 0.0
    %162 = vmatpush1.msra.mxu0 0.0
    %163 = vmatprep.subr.mxu0 0.0
    %164 = vmatpush1.msra.mxu0 0.0
    %165 = vmatprep.subr.mxu0 0.0
    %166 = vmatpush1.msra.mxu0 0.0
    %167 = vmatprep.subr.mxu0 0.0
    %168 = vmatpush1.msra.mxu0 0.0
    %169 = vmatprep.subr.mxu0 0.0
    %170 = vmatpush1.msra.mxu0 %v112
    %171 = vmatprep.subr.mxu0 0.0
    %172 = vmatpush1.msra.mxu0 %v111
    %173 = vmatprep.subr.mxu0 0.0
    %174 = vmatpush1.msra.mxu0 %v110
    %175 = vmatprep.subr.mxu0 0.0
    %176 = vmatpush1.msra.mxu0 %v109
    %177 = vmatprep.subr.mxu0 0.0
    %178 = vmatpush2.msra.mxu0 0.0
    %179 = vmatprep.subr.mxu0 0.0
    %180 = vmatpush2.msra.mxu0 0.0
    %181 = vmatprep.subr.mxu0 0.0
    %182 = vmatpush2.msra.mxu0 0.0
    %183 = vmatprep.subr.mxu0 0.0
    %184 = vmatpush2.msra.mxu0 0.0
    %185 = vmatprep.subr.mxu0 0.0
    %186 = vmatpush2.msra.mxu0 0.0
    %187 = vmatprep.subr.mxu0 0.0
    %188 = vmatpush2.msra.mxu0 0.0
    %189 = vmatprep.subr.mxu0 0.0
    %190 = vmatpush2.msra.mxu0 0.0
    %191 = vmatprep.subr.mxu0 0.0
    %192 = vmatpush2.msra.mxu0 0.0
    %193 = vmatprep.subr.mxu0 0.0
    %194 = vmatpush2.msra.mxu0 0.0
    %195 = vmatprep.subr.mxu0 0.0
    %196 = vmatpush2.msra.mxu0 0.0
    %197 = vmatprep.subr.mxu0 0.0
    %198 = vmatpush2.msra.mxu0 0.0
    %199 = vmatprep.subr.mxu0 0.0
    %200 = vmatpush2.msra.mxu0 0.0
    %201 = vmatprep.subr.mxu0 0.0
    %202 = vmatpush2.msra.mxu0 0.0
    %203 = vmatprep.subr.mxu0 0.0
    %204 = vmatpush2.msra.mxu0 0.0
    %205 = vmatprep.subr.mxu0 0.0
    %206 = vmatpush2.msra.mxu0 0.0
    %207 = vmatprep.subr.mxu0 0.0
    %208 = vmatpush2.msra.mxu0 0.0
    %209 = vmatprep.mubr.f32.mxu0 0.0
    %210 = vmatmul.mubr.f32.gmra.mxu0 %v122
    %v211 = vpop.f32.mrf.mxu0
    %v212 = vadd.f32 %v118, %v211
    %v213 = vpop.f32.mrf.mxu0
    %214 = vmatprep.mubr.f32.mxu0 0.0
    %215 = vmatmul.mubr.f32.gmra.mxu0 %v125
    %v216 = vpop.f32.mrf.mxu0
    %v217 = vadd.f32 %v118, %v216
    %v218 = vpop.f32.mrf.mxu0
    %219 = vmatprep.mubr.f32.mxu0 0.0
    %220 = vmatmul.mubr.f32.gmra.mxu0 %v128
    %v221 = vpop.f32.mrf.mxu0
    %v222 = vadd.f32 %v118, %v221
    %v223 = vpop.f32.mrf.mxu0
    %224 = vmatprep.mubr.f32.mxu0 0.0
    %225 = vmatmul.mubr.f32.gmra.mxu0 %v131
    %v226 = vpop.f32.mrf.mxu0
    %v227 = vadd.f32 %v118, %v226
    %v228 = vpop.f32.mrf.mxu0
    %229 = vmatprep.mubr.f32.mxu0 0.0
    %230 = vmatmul.mubr.f32.gmra.mxu0 %v134
    %v231 = vpop.f32.mrf.mxu0
    %v232 = vadd.f32 %v118, %v231
    %v233 = vpop.f32.mrf.mxu0
    %234 = vmatprep.mubr.f32.mxu0 0.0
    %235 = vmatmul.mubr.f32.gmra.mxu0 %v137
    %v236 = vpop.f32.mrf.mxu0
    %v237 = vadd.f32 %v118, %v236
    %v238 = vpop.f32.mrf.mxu0
    %239 = vmatprep.mubr.f32.mxu0 0.0
    %240 = vmatmul.mubr.f32.gmra.mxu0 %v140
    %v241 = vpop.f32.mrf.mxu0
    %v242 = vadd.f32 %v118, %v241
    %v243 = vpop.f32.mrf.mxu0
    %244 = vmatprep.mubr.f32.mxu0 0.0
    %245 = vmatmul.mubr.f32.gmra.mxu0 %v143
    %v246 = vpop.f32.mrf.mxu0
    %v247 = vadd.f32 %v118, %v246
    %v248 = vpop.f32.mrf.mxu0
    %249 = vdwg.mxu0
    %vm250 = vcmask 523264
    %251 = vst.msk [vmem:[#allocation2] sm:$0xff] %vm250, %v212
    %252 = vst.msk [vmem:[#allocation2 + $0x8] sm:$0xff] %vm250, %v217
    %253 = vst.msk [vmem:[#allocation2 + $0x10] sm:$0xff] %vm250, %v222
    %254 = vst.msk [vmem:[#allocation2 + $0x18] sm:$0xff] %vm250, %v227
    %255 = vst.msk [vmem:[#allocation2 + $0x20] sm:$0xff] %vm250, %v232
    %256 = vst.msk [vmem:[#allocation2 + $0x28] sm:$0xff] %vm250, %v237
    %257 = vst.msk [vmem:[#allocation2 + $0x30] sm:$0xff] %vm250, %v242
    %258 = vst.msk [vmem:[#allocation2 + $0x38] sm:$0xff] %vm250, %v247
    %v259 = vld [vmem:[%s7] sm:$0x1]
    %v261 = vlaneseq
    %v262 = vshrl.u32 %v261, 7
    %v263 = vsub.s32 0, %v262
    %v264 = vrot.slane %v259, %v263
    %v265 = vld [vmem:[%s8] sm:$0x1]
    %v267 = vlaneseq
    %v268 = vshrl.u32 %v267, 7
    %v269 = vsub.s32 0, %v268
    %v270 = vrot.slane %v265, %v269
    %vm272 = vcmask 125952
    %273 = vst.msk [vmem:[#allocation3] sm:$0xf] %vm272, %v264
    %s274 = scalar_lea.vmem [#allocation4], 32
    %275 = vst.msk [vmem:[%s274] sm:$0xf] %vm272, %v264
    %v276 = vld [vmem:[#allocation10] sm:$0xff]
    %v277 = vld [vmem:[#allocation10 + $0x8] sm:$0xff]
    %v278 = vld [vmem:[#allocation2] sm:$0xff]
    %vm279 = vcmask 130048
    %v280 = vsel %vm279, %v264, 0
    %282 = vmatprep.subr.mxu0 0.0
    %283 = vmatpush1.msra.mxu0 0.0
    %284 = vmatprep.subr.mxu0 0.0
    %285 = vmatpush1.msra.mxu0 0.0
    %286 = vmatprep.subr.mxu0 0.0
    %287 = vmatpush1.msra.mxu0 0.0
    %288 = vmatprep.subr.mxu0 0.0
    %289 = vmatpush1.msra.mxu0 0.0
    %290 = vmatprep.subr.mxu0 0.0
    %291 = vmatpush1.msra.mxu0 0.0
    %292 = vmatprep.subr.mxu0 0.0
    %293 = vmatpush1.msra.mxu0 0.0
    %294 = vmatprep.subr.mxu0 0.0
    %295 = vmatpush1.msra.mxu0 0.0
    %296 = vmatprep.subr.mxu0 0.0
    %297 = vmatpush1.msra.mxu0 0.0
    %298 = vmatprep.subr.mxu0 0.0
    %299 = vmatpush1.msra.mxu0 0.0
    %300 = vmatprep.subr.mxu0 0.0
    %301 = vmatpush1.msra.mxu0 0.0
    %302 = vmatprep.subr.mxu0 0.0
    %303 = vmatpush1.msra.mxu0 0.0
    %304 = vmatprep.subr.mxu0 0.0
    %305 = vmatpush1.msra.mxu0 0.0
    %306 = vmatprep.subr.mxu0 0.0
    %307 = vmatpush1.msra.mxu0 0.0
    %308 = vmatprep.subr.mxu0 0.0
    %309 = vmatpush1.msra.mxu0 0.0
    %310 = vmatprep.subr.mxu0 0.0
    %311 = vmatpush1.msra.mxu0 %v277
    %312 = vmatprep.subr.mxu0 0.0
    %313 = vmatpush1.msra.mxu0 %v276
    %314 = vmatprep.subr.mxu0 0.0
    %315 = vmatpush2.msra.mxu0 0.0
    %316 = vmatprep.subr.mxu0 0.0
    %317 = vmatpush2.msra.mxu0 0.0
    %318 = vmatprep.subr.mxu0 0.0
    %319 = vmatpush2.msra.mxu0 0.0
    %320 = vmatprep.subr.mxu0 0.0
    %321 = vmatpush2.msra.mxu0 0.0
    %322 = vmatprep.subr.mxu0 0.0
    %323 = vmatpush2.msra.mxu0 0.0
    %324 = vmatprep.subr.mxu0 0.0
    %325 = vmatpush2.msra.mxu0 0.0
    %326 = vmatprep.subr.mxu0 0.0
    %327 = vmatpush2.msra.mxu0 0.0
    %328 = vmatprep.subr.mxu0 0.0
    %329 = vmatpush2.msra.mxu0 0.0
    %330 = vmatprep.subr.mxu0 0.0
    %331 = vmatpush2.msra.mxu0 0.0
    %332 = vmatprep.subr.mxu0 0.0
    %333 = vmatpush2.msra.mxu0 0.0
    %334 = vmatprep.subr.mxu0 0.0
    %335 = vmatpush2.msra.mxu0 0.0
    %336 = vmatprep.subr.mxu0 0.0
    %337 = vmatpush2.msra.mxu0 0.0
    %338 = vmatprep.subr.mxu0 0.0
    %339 = vmatpush2.msra.mxu0 0.0
    %340 = vmatprep.subr.mxu0 0.0
    %341 = vmatpush2.msra.mxu0 0.0
    %342 = vmatprep.subr.mxu0 0.0
    %343 = vmatpush2.msra.mxu0 0.0
    %344 = vmatprep.subr.mxu0 0.0
    %345 = vmatpush2.msra.mxu0 0.0
    %346 = vmatprep.mubr.f32.mxu0 0.0
    %347 = vmatmul.mubr.f32.gmra.mxu0 %v280
    %v348 = vpop.f32.mrf.mxu0
    %v349 = vadd.f32 0.0, %v348
    %v350 = vpop.f32.mrf.mxu0
    %351 = vdwg.mxu0
    %v352 = vadd.f32 %v278, %v349
    %v353 = vxor.u32 %v352, 2147483648
    %v354 = vmul.f32 %v353, 1.442695
    %v355 = vpow.pop %v354
    %v356 = vadd.f32 %v355, 1.0
    %v357 = vrcp.pop %v356
    %v358 = vmul.f32 1.0, %v357
    %v359 = vtanh.pop %v352
    %360 = vrot.lane.b32.xlu0 %v270, 16
    %v361 = vpop.permute.xlu0 %360
    %v363 = vmul.f32 %v358, %v361
    %365 = vrot.lane.b32.xlu0 %v359, 96
    %v366 = vpop.permute.xlu0 %365
    %v368 = vmul.f32 %v358, %v366
    %370 = vrot.lane.b32.xlu0 %v368, 16
    %v371 = vpop.permute.xlu0 %370
    %v373 = vadd.f32 %v363, %v371
    %v374 = vtanh.pop %v373
    %376 = vrot.lane.b32.xlu0 %v374, 32
    %v377 = vpop.permute.xlu0 %376
    %v379 = vmul.f32 %v358, %v377
    %381 = vrot.lane.b32.xlu0 %v379, 80
    %v382 = vpop.permute.xlu0 %381
    %s384 = scalar_lea.vmem [#allocation3], 4
    %385 = vst.msk [vmem:[%s384] sm:$0xf] %vm272, %v382
    %s386 = scalar_lea.vmem [#allocation4], 28
    %vm387 = vcmask 130052
    %388 = vst.msk [vmem:[%s386 - $0x4] sm:$0xf0] %vm387, %v382
    %s389 = scalar_lea.vmem [#allocation2], 8
    %v390 = vld [vmem:[%s389] sm:$0xff]
    %v391 = vsel %vm279, %v382, 0
    %393 = vmatprep.subr.mxu0 0.0
    %394 = vmatpush1.msra.mxu0 0.0
    %395 = vmatprep.subr.mxu0 0.0
    %396 = vmatpush1.msra.mxu0 0.0
    %397 = vmatprep.subr.mxu0 0.0
    %398 = vmatpush1.msra.mxu0 0.0
    %399 = vmatprep.subr.mxu0 0.0
    %400 = vmatpush1.msra.mxu0 0.0
    %401 = vmatprep.subr.mxu0 0.0
    %402 = vmatpush1.msra.mxu0 0.0
    %403 = vmatprep.subr.mxu0 0.0
    %404 = vmatpush1.msra.mxu0 0.0
    %405 = vmatprep.subr.mxu0 0.0
    %406 = vmatpush1.msra.mxu0 0.0
    %407 = vmatprep.subr.mxu0 0.0
    %408 = vmatpush1.msra.mxu0 0.0
    %409 = vmatprep.subr.mxu0 0.0
    %410 = vmatpush1.msra.mxu0 0.0
    %411 = vmatprep.subr.mxu0 0.0
    %412 = vmatpush1.msra.mxu0 0.0
    %413 = vmatprep.subr.mxu0 0.0
    %414 = vmatpush1.msra.mxu0 0.0
    %415 = vmatprep.subr.mxu0 0.0
    %416 = vmatpush1.msra.mxu0 0.0
    %417 = vmatprep.subr.mxu0 0.0
    %418 = vmatpush1.msra.mxu0 0.0
    %419 = vmatprep.subr.mxu0 0.0
    %420 = vmatpush1.msra.mxu0 0.0
    %421 = vmatprep.subr.mxu0 0.0
    %422 = vmatpush1.msra.mxu0 %v277
    %423 = vmatprep.subr.mxu0 0.0
    %424 = vmatpush1.msra.mxu0 %v276
    %425 = vmatprep.subr.mxu0 0.0
    %426 = vmatpush2.msra.mxu0 0.0
    %427 = vmatprep.subr.mxu0 0.0
    %428 = vmatpush2.msra.mxu0 0.0
    %429 = vmatprep.subr.mxu0 0.0
    %430 = vmatpush2.msra.mxu0 0.0
    %431 = vmatprep.subr.mxu0 0.0
    %432 = vmatpush2.msra.mxu0 0.0
    %433 = vmatprep.subr.mxu0 0.0
    %434 = vmatpush2.msra.mxu0 0.0
    %435 = vmatprep.subr.mxu0 0.0
    %436 = vmatpush2.msra.mxu0 0.0
    %437 = vmatprep.subr.mxu0 0.0
    %438 = vmatpush2.msra.mxu0 0.0
    %439 = vmatprep.subr.mxu0 0.0
    %440 = vmatpush2.msra.mxu0 0.0
    %441 = vmatprep.subr.mxu0 0.0
    %442 = vmatpush2.msra.mxu0 0.0
    %443 = vmatprep.subr.mxu0 0.0
    %444 = vmatpush2.msra.mxu0 0.0
    %445 = vmatprep.subr.mxu0 0.0
    %446 = vmatpush2.msra.mxu0 0.0
    %447 = vmatprep.subr.mxu0 0.0
    %448 = vmatpush2.msra.mxu0 0.0
    %449 = vmatprep.subr.mxu0 0.0
    %450 = vmatpush2.msra.mxu0 0.0
    %451 = vmatprep.subr.mxu0 0.0
    %452 = vmatpush2.msra.mxu0 0.0
    %453 = vmatprep.subr.mxu0 0.0
    %454 = vmatpush2.msra.mxu0 0.0
    %455 = vmatprep.subr.mxu0 0.0
    %456 = vmatpush2.msra.mxu0 0.0
    %457 = vmatprep.mubr.f32.mxu0 0.0
    %458 = vmatmul.mubr.f32.gmra.mxu0 %v391
    %v459 = vpop.f32.mrf.mxu0
    %v460 = vadd.f32 0.0, %v459
    %v461 = vpop.f32.mrf.mxu0
    %462 = vdwg.mxu0
    %v463 = vadd.f32 %v390, %v460
    %v464 = vxor.u32 %v463, 2147483648
    %v465 = vmul.f32 %v464, 1.442695
    %v466 = vpow.pop %v465
    %v467 = vadd.f32 %v466, 1.0
    %v468 = vrcp.pop %v467
    %v469 = vmul.f32 1.0, %v468
    %v470 = vtanh.pop %v463
    %v471 = vmul.f32 %v469, %v373
    %473 = vrot.lane.b32.xlu0 %v470, 96
    %v474 = vpop.permute.xlu0 %473
    %v476 = vmul.f32 %v469, %v474
    %478 = vrot.lane.b32.xlu0 %v476, 16
    %v479 = vpop.permute.xlu0 %478
    %v481 = vadd.f32 %v471, %v479
    %v482 = vtanh.pop %v481
    %484 = vrot.lane.b32.xlu0 %v482, 32
    %v485 = vpop.permute.xlu0 %484
    %v487 = vmul.f32 %v469, %v485
    %489 = vrot.lane.b32.xlu0 %v487, 80
    %v490 = vpop.permute.xlu0 %489
    %s492 = scalar_lea.vmem [#allocation3], 8
    %493 = vst.msk [vmem:[%s492] sm:$0xf] %vm272, %v490
    %s494 = scalar_lea.vmem [#allocation4], 24
    %495 = vst.msk [vmem:[%s494 - $0x4] sm:$0xf0] %vm387, %v490
    %s496 = scalar_lea.vmem [#allocation2], 16
    %v497 = vld [vmem:[%s496] sm:$0xff]
    %v498 = vsel %vm279, %v490, 0
    %500 = vmatprep.subr.mxu0 0.0
    %501 = vmatpush1.msra.mxu0 0.0
    %502 = vmatprep.subr.mxu0 0.0
    %503 = vmatpush1.msra.mxu0 0.0
    %504 = vmatprep.subr.mxu0 0.0
    %505 = vmatpush1.msra.mxu0 0.0
    %506 = vmatprep.subr.mxu0 0.0
    %507 = vmatpush1.msra.mxu0 0.0
    %508 = vmatprep.subr.mxu0 0.0
    %509 = vmatpush1.msra.mxu0 0.0
    %510 = vmatprep.subr.mxu0 0.0
    %511 = vmatpush1.msra.mxu0 0.0
    %512 = vmatprep.subr.mxu0 0.0
    %513 = vmatpush1.msra.mxu0 0.0
    %514 = vmatprep.subr.mxu0 0.0
    %515 = vmatpush1.msra.mxu0 0.0
    %516 = vmatprep.subr.mxu0 0.0
    %517 = vmatpush1.msra.mxu0 0.0
    %518 = vmatprep.subr.mxu0 0.0
    %519 = vmatpush1.msra.mxu0 0.0
    %520 = vmatprep.subr.mxu0 0.0
    %521 = vmatpush1.msra.mxu0 0.0
    %522 = vmatprep.subr.mxu0 0.0
    %523 = vmatpush1.msra.mxu0 0.0
    %524 = vmatprep.subr.mxu0 0.0
    %525 = vmatpush1.msra.mxu0 0.0
    %526 = vmatprep.subr.mxu0 0.0
    %527 = vmatpush1.msra.mxu0 0.0
    %528 = vmatprep.subr.mxu0 0.0
    %529 = vmatpush1.msra.mxu0 %v277
    %530 = vmatprep.subr.mxu0 0.0
    %531 = vmatpush1.msra.mxu0 %v276
    %532 = vmatprep.subr.mxu0 0.0
    %533 = vmatpush2.msra.mxu0 0.0
    %534 = vmatprep.subr.mxu0 0.0
    %535 = vmatpush2.msra.mxu0 0.0
    %536 = vmatprep.subr.mxu0 0.0
    %537 = vmatpush2.msra.mxu0 0.0
    %538 = vmatprep.subr.mxu0 0.0
    %539 = vmatpush2.msra.mxu0 0.0
    %540 = vmatprep.subr.mxu0 0.0
    %541 = vmatpush2.msra.mxu0 0.0
    %542 = vmatprep.subr.mxu0 0.0
    %543 = vmatpush2.msra.mxu0 0.0
    %544 = vmatprep.subr.mxu0 0.0
    %545 = vmatpush2.msra.mxu0 0.0
    %546 = vmatprep.subr.mxu0 0.0
    %547 = vmatpush2.msra.mxu0 0.0
    %548 = vmatprep.subr.mxu0 0.0
    %549 = vmatpush2.msra.mxu0 0.0
    %550 = vmatprep.subr.mxu0 0.0
    %551 = vmatpush2.msra.mxu0 0.0
    %552 = vmatprep.subr.mxu0 0.0
    %553 = vmatpush2.msra.mxu0 0.0
    %554 = vmatprep.subr.mxu0 0.0
    %555 = vmatpush2.msra.mxu0 0.0
    %556 = vmatprep.subr.mxu0 0.0
    %557 = vmatpush2.msra.mxu0 0.0
    %558 = vmatprep.subr.mxu0 0.0
    %559 = vmatpush2.msra.mxu0 0.0
    %560 = vmatprep.subr.mxu0 0.0
    %561 = vmatpush2.msra.mxu0 0.0
    %562 = vmatprep.subr.mxu0 0.0
    %563 = vmatpush2.msra.mxu0 0.0
    %564 = vmatprep.mubr.f32.mxu0 0.0
    %565 = vmatmul.mubr.f32.gmra.mxu0 %v498
    %v566 = vpop.f32.mrf.mxu0
    %v567 = vadd.f32 0.0, %v566
    %v568 = vpop.f32.mrf.mxu0
    %569 = vdwg.mxu0
    %v570 = vadd.f32 %v497, %v567
    %v571 = vxor.u32 %v570, 2147483648
    %v572 = vmul.f32 %v571, 1.442695
    %v573 = vpow.pop %v572
    %v574 = vadd.f32 %v573, 1.0
    %v575 = vrcp.pop %v574
    %v576 = vmul.f32 1.0, %v575
    %v577 = vtanh.pop %v570
    %v578 = vmul.f32 %v576, %v481
    %580 = vrot.lane.b32.xlu0 %v577, 96
    %v581 = vpop.permute.xlu0 %580
    %v583 = vmul.f32 %v576, %v581
    %585 = vrot.lane.b32.xlu0 %v583, 16
    %v586 = vpop.permute.xlu0 %585
    %v588 = vadd.f32 %v578, %v586
    %v589 = vtanh.pop %v588
    %591 = vrot.lane.b32.xlu0 %v589, 32
    %v592 = vpop.permute.xlu0 %591
    %v594 = vmul.f32 %v576, %v592
    %596 = vrot.lane.b32.xlu0 %v594, 80
    %v597 = vpop.permute.xlu0 %596
    %s599 = scalar_lea.vmem [#allocation3], 12
    %600 = vst.msk [vmem:[%s599] sm:$0xf] %vm272, %v597
    %s601 = scalar_lea.vmem [#allocation4], 20
    %602 = vst.msk [vmem:[%s601 - $0x4] sm:$0xf0] %vm387, %v597
    %s603 = scalar_lea.vmem [#allocation2], 24
    %v604 = vld [vmem:[%s603] sm:$0xff]
    %v605 = vsel %vm279, %v597, 0
    %607 = vmatprep.subr.mxu0 0.0
    %608 = vmatpush1.msra.mxu0 0.0
    %609 = vmatprep.subr.mxu0 0.0
    %610 = vmatpush1.msra.mxu0 0.0
    %611 = vmatprep.subr.mxu0 0.0
    %612 = vmatpush1.msra.mxu0 0.0
    %613 = vmatprep.subr.mxu0 0.0
    %614 = vmatpush1.msra.mxu0 0.0
    %615 = vmatprep.subr.mxu0 0.0
    %616 = vmatpush1.msra.mxu0 0.0
    %617 = vmatprep.subr.mxu0 0.0
    %618 = vmatpush1.msra.mxu0 0.0
    %619 = vmatprep.subr.mxu0 0.0
    %620 = vmatpush1.msra.mxu0 0.0
    %621 = vmatprep.subr.mxu0 0.0
    %622 = vmatpush1.msra.mxu0 0.0
    %623 = vmatprep.subr.mxu0 0.0
    %624 = vmatpush1.msra.mxu0 0.0
    %625 = vmatprep.subr.mxu0 0.0
    %626 = vmatpush1.msra.mxu0 0.0
    %627 = vmatprep.subr.mxu0 0.0
    %628 = vmatpush1.msra.mxu0 0.0
    %629 = vmatprep.subr.mxu0 0.0
    %630 = vmatpush1.msra.mxu0 0.0
    %631 = vmatprep.subr.mxu0 0.0
    %632 = vmatpush1.msra.mxu0 0.0
    %633 = vmatprep.subr.mxu0 0.0
    %634 = vmatpush1.msra.mxu0 0.0
    %635 = vmatprep.subr.mxu0 0.0
    %636 = vmatpush1.msra.mxu0 %v277
    %637 = vmatprep.subr.mxu0 0.0
    %638 = vmatpush1.msra.mxu0 %v276
    %639 = vmatprep.subr.mxu0 0.0
    %640 = vmatpush2.msra.mxu0 0.0
    %641 = vmatprep.subr.mxu0 0.0
    %642 = vmatpush2.msra.mxu0 0.0
    %643 = vmatprep.subr.mxu0 0.0
    %644 = vmatpush2.msra.mxu0 0.0
    %645 = vmatprep.subr.mxu0 0.0
    %646 = vmatpush2.msra.mxu0 0.0
    %647 = vmatprep.subr.mxu0 0.0
    %648 = vmatpush2.msra.mxu0 0.0
    %649 = vmatprep.subr.mxu0 0.0
    %650 = vmatpush2.msra.mxu0 0.0
    %651 = vmatprep.subr.mxu0 0.0
    %652 = vmatpush2.msra.mxu0 0.0
    %653 = vmatprep.subr.mxu0 0.0
    %654 = vmatpush2.msra.mxu0 0.0
    %655 = vmatprep.subr.mxu0 0.0
    %656 = vmatpush2.msra.mxu0 0.0
    %657 = vmatprep.subr.mxu0 0.0
    %658 = vmatpush2.msra.mxu0 0.0
    %659 = vmatprep.subr.mxu0 0.0
    %660 = vmatpush2.msra.mxu0 0.0
    %661 = vmatprep.subr.mxu0 0.0
    %662 = vmatpush2.msra.mxu0 0.0
    %663 = vmatprep.subr.mxu0 0.0
    %664 = vmatpush2.msra.mxu0 0.0
    %665 = vmatprep.subr.mxu0 0.0
    %666 = vmatpush2.msra.mxu0 0.0
    %667 = vmatprep.subr.mxu0 0.0
    %668 = vmatpush2.msra.mxu0 0.0
    %669 = vmatprep.subr.mxu0 0.0
    %670 = vmatpush2.msra.mxu0 0.0
    %671 = vmatprep.mubr.f32.mxu0 0.0
    %672 = vmatmul.mubr.f32.gmra.mxu0 %v605
    %v673 = vpop.f32.mrf.mxu0
    %v674 = vadd.f32 0.0, %v673
    %v675 = vpop.f32.mrf.mxu0
    %676 = vdwg.mxu0
    %v677 = vadd.f32 %v604, %v674
    %v678 = vxor.u32 %v677, 2147483648
    %v679 = vmul.f32 %v678, 1.442695
    %v680 = vpow.pop %v679
    %v681 = vadd.f32 %v680, 1.0
    %v682 = vrcp.pop %v681
    %v683 = vmul.f32 1.0, %v682
    %v684 = vtanh.pop %v677
    %v685 = vmul.f32 %v683, %v588
    %687 = vrot.lane.b32.xlu0 %v684, 96
    %v688 = vpop.permute.xlu0 %687
    %v690 = vmul.f32 %v683, %v688
    %692 = vrot.lane.b32.xlu0 %v690, 16
    %v693 = vpop.permute.xlu0 %692
    %v695 = vadd.f32 %v685, %v693
    %v696 = vtanh.pop %v695
    %698 = vrot.lane.b32.xlu0 %v696, 32
    %v699 = vpop.permute.xlu0 %698
    %v701 = vmul.f32 %v683, %v699
    %703 = vrot.lane.b32.xlu0 %v701, 80
    %v704 = vpop.permute.xlu0 %703
    %s706 = scalar_lea.vmem [#allocation3], 16
    %707 = vst.msk [vmem:[%s706] sm:$0xf] %vm272, %v704
    %s708 = scalar_lea.vmem [#allocation4], 16
    %709 = vst.msk [vmem:[%s708 - $0x4] sm:$0xf0] %vm387, %v704
    %s710 = scalar_lea.vmem [#allocation2], 32
    %v711 = vld [vmem:[%s710] sm:$0xff]
    %v712 = vsel %vm279, %v704, 0
    %714 = vmatprep.subr.mxu0 0.0
    %715 = vmatpush1.msra.mxu0 0.0
    %716 = vmatprep.subr.mxu0 0.0
    %717 = vmatpush1.msra.mxu0 0.0
    %718 = vmatprep.subr.mxu0 0.0
    %719 = vmatpush1.msra.mxu0 0.0
    %720 = vmatprep.subr.mxu0 0.0
    %721 = vmatpush1.msra.mxu0 0.0
    %722 = vmatprep.subr.mxu0 0.0
    %723 = vmatpush1.msra.mxu0 0.0
    %724 = vmatprep.subr.mxu0 0.0
    %725 = vmatpush1.msra.mxu0 0.0
    %726 = vmatprep.subr.mxu0 0.0
    %727 = vmatpush1.msra.mxu0 0.0
    %728 = vmatprep.subr.mxu0 0.0
    %729 = vmatpush1.msra.mxu0 0.0
    %730 = vmatprep.subr.mxu0 0.0
    %731 = vmatpush1.msra.mxu0 0.0
    %732 = vmatprep.subr.mxu0 0.0
    %733 = vmatpush1.msra.mxu0 0.0
    %734 = vmatprep.subr.mxu0 0.0
    %735 = vmatpush1.msra.mxu0 0.0
    %736 = vmatprep.subr.mxu0 0.0
    %737 = vmatpush1.msra.mxu0 0.0
    %738 = vmatprep.subr.mxu0 0.0
    %739 = vmatpush1.msra.mxu0 0.0
    %740 = vmatprep.subr.mxu0 0.0
    %741 = vmatpush1.msra.mxu0 0.0
    %742 = vmatprep.subr.mxu0 0.0
    %743 = vmatpush1.msra.mxu0 %v277
    %744 = vmatprep.subr.mxu0 0.0
    %745 = vmatpush1.msra.mxu0 %v276
    %746 = vmatprep.subr.mxu0 0.0
    %747 = vmatpush2.msra.mxu0 0.0
    %748 = vmatprep.subr.mxu0 0.0
    %749 = vmatpush2.msra.mxu0 0.0
    %750 = vmatprep.subr.mxu0 0.0
    %751 = vmatpush2.msra.mxu0 0.0
    %752 = vmatprep.subr.mxu0 0.0
    %753 = vmatpush2.msra.mxu0 0.0
    %754 = vmatprep.subr.mxu0 0.0
    %755 = vmatpush2.msra.mxu0 0.0
    %756 = vmatprep.subr.mxu0 0.0
    %757 = vmatpush2.msra.mxu0 0.0
    %758 = vmatprep.subr.mxu0 0.0
    %759 = vmatpush2.msra.mxu0 0.0
    %760 = vmatprep.subr.mxu0 0.0
    %761 = vmatpush2.msra.mxu0 0.0
    %762 = vmatprep.subr.mxu0 0.0
    %763 = vmatpush2.msra.mxu0 0.0
    %764 = vmatprep.subr.mxu0 0.0
    %765 = vmatpush2.msra.mxu0 0.0
    %766 = vmatprep.subr.mxu0 0.0
    %767 = vmatpush2.msra.mxu0 0.0
    %768 = vmatprep.subr.mxu0 0.0
    %769 = vmatpush2.msra.mxu0 0.0
    %770 = vmatprep.subr.mxu0 0.0
    %771 = vmatpush2.msra.mxu0 0.0
    %772 = vmatprep.subr.mxu0 0.0
    %773 = vmatpush2.msra.mxu0 0.0
    %774 = vmatprep.subr.mxu0 0.0
    %775 = vmatpush2.msra.mxu0 0.0
    %776 = vmatprep.subr.mxu0 0.0
    %777 = vmatpush2.msra.mxu0 0.0
    %778 = vmatprep.mubr.f32.mxu0 0.0
    %779 = vmatmul.mubr.f32.gmra.mxu0 %v712
    %v780 = vpop.f32.mrf.mxu0
    %v781 = vadd.f32 0.0, %v780
    %v782 = vpop.f32.mrf.mxu0
    %783 = vdwg.mxu0
    %v784 = vadd.f32 %v711, %v781
    %v785 = vxor.u32 %v784, 2147483648
    %v786 = vmul.f32 %v785, 1.442695
    %v787 = vpow.pop %v786
    %v788 = vadd.f32 %v787, 1.0
    %v789 = vrcp.pop %v788
    %v790 = vmul.f32 1.0, %v789
    %v791 = vtanh.pop %v784
    %v792 = vmul.f32 %v790, %v695
    %794 = vrot.lane.b32.xlu0 %v791, 96
    %v795 = vpop.permute.xlu0 %794
    %v797 = vmul.f32 %v790, %v795
    %799 = vrot.lane.b32.xlu0 %v797, 16
    %v800 = vpop.permute.xlu0 %799
    %v802 = vadd.f32 %v792, %v800
    %v803 = vtanh.pop %v802
    %805 = vrot.lane.b32.xlu0 %v803, 32
    %v806 = vpop.permute.xlu0 %805
    %v808 = vmul.f32 %v790, %v806
    %810 = vrot.lane.b32.xlu0 %v808, 80
    %v811 = vpop.permute.xlu0 %810
    %s813 = scalar_lea.vmem [#allocation3], 20
    %814 = vst.msk [vmem:[%s813] sm:$0xf] %vm272, %v811
    %s815 = scalar_lea.vmem [#allocation4], 12
    %816 = vst.msk [vmem:[%s815 - $0x4] sm:$0xf0] %vm387, %v811
    %s817 = scalar_lea.vmem [#allocation2], 40
    %v818 = vld [vmem:[%s817] sm:$0xff]
    %v819 = vsel %vm279, %v811, 0
    %821 = vmatprep.subr.mxu0 0.0
    %822 = vmatpush1.msra.mxu0 0.0
    %823 = vmatprep.subr.mxu0 0.0
    %824 = vmatpush1.msra.mxu0 0.0
    %825 = vmatprep.subr.mxu0 0.0
    %826 = vmatpush1.msra.mxu0 0.0
    %827 = vmatprep.subr.mxu0 0.0
    %828 = vmatpush1.msra.mxu0 0.0
    %829 = vmatprep.subr.mxu0 0.0
    %830 = vmatpush1.msra.mxu0 0.0
    %831 = vmatprep.subr.mxu0 0.0
    %832 = vmatpush1.msra.mxu0 0.0
    %833 = vmatprep.subr.mxu0 0.0
    %834 = vmatpush1.msra.mxu0 0.0
    %835 = vmatprep.subr.mxu0 0.0
    %836 = vmatpush1.msra.mxu0 0.0
    %837 = vmatprep.subr.mxu0 0.0
    %838 = vmatpush1.msra.mxu0 0.0
    %839 = vmatprep.subr.mxu0 0.0
    %840 = vmatpush1.msra.mxu0 0.0
    %841 = vmatprep.subr.mxu0 0.0
    %842 = vmatpush1.msra.mxu0 0.0
    %843 = vmatprep.subr.mxu0 0.0
    %844 = vmatpush1.msra.mxu0 0.0
    %845 = vmatprep.subr.mxu0 0.0
    %846 = vmatpush1.msra.mxu0 0.0
    %847 = vmatprep.subr.mxu0 0.0
    %848 = vmatpush1.msra.mxu0 0.0
    %849 = vmatprep.subr.mxu0 0.0
    %850 = vmatpush1.msra.mxu0 %v277
    %851 = vmatprep.subr.mxu0 0.0
    %852 = vmatpush1.msra.mxu0 %v276
    %853 = vmatprep.subr.mxu0 0.0
    %854 = vmatpush2.msra.mxu0 0.0
    %855 = vmatprep.subr.mxu0 0.0
    %856 = vmatpush2.msra.mxu0 0.0
    %857 = vmatprep.subr.mxu0 0.0
    %858 = vmatpush2.msra.mxu0 0.0
    %859 = vmatprep.subr.mxu0 0.0
    %860 = vmatpush2.msra.mxu0 0.0
    %861 = vmatprep.subr.mxu0 0.0
    %862 = vmatpush2.msra.mxu0 0.0
    %863 = vmatprep.subr.mxu0 0.0
    %864 = vmatpush2.msra.mxu0 0.0
    %865 = vmatprep.subr.mxu0 0.0
    %866 = vmatpush2.msra.mxu0 0.0
    %867 = vmatprep.subr.mxu0 0.0
    %868 = vmatpush2.msra.mxu0 0.0
    %869 = vmatprep.subr.mxu0 0.0
    %870 = vmatpush2.msra.mxu0 0.0
    %871 = vmatprep.subr.mxu0 0.0
    %872 = vmatpush2.msra.mxu0 0.0
    %873 = vmatprep.subr.mxu0 0.0
    %874 = vmatpush2.msra.mxu0 0.0
    %875 = vmatprep.subr.mxu0 0.0
    %876 = vmatpush2.msra.mxu0 0.0
    %877 = vmatprep.subr.mxu0 0.0
    %878 = vmatpush2.msra.mxu0 0.0
    %879 = vmatprep.subr.mxu0 0.0
    %880 = vmatpush2.msra.mxu0 0.0
    %881 = vmatprep.subr.mxu0 0.0
    %882 = vmatpush2.msra.mxu0 0.0
    %883 = vmatprep.subr.mxu0 0.0
    %884 = vmatpush2.msra.mxu0 0.0
    %885 = vmatprep.mubr.f32.mxu0 0.0
    %886 = vmatmul.mubr.f32.gmra.mxu0 %v819
    %v887 = vpop.f32.mrf.mxu0
    %v888 = vadd.f32 0.0, %v887
    %v889 = vpop.f32.mrf.mxu0
    %890 = vdwg.mxu0
    %v891 = vadd.f32 %v818, %v888
    %v892 = vxor.u32 %v891, 2147483648
    %v893 = vmul.f32 %v892, 1.442695
    %v894 = vpow.pop %v893
    %v895 = vadd.f32 %v894, 1.0
    %v896 = vrcp.pop %v895
    %v897 = vmul.f32 1.0, %v896
    %v898 = vtanh.pop %v891
    %v899 = vmul.f32 %v897, %v802
    %901 = vrot.lane.b32.xlu0 %v898, 96
    %v902 = vpop.permute.xlu0 %901
    %v904 = vmul.f32 %v897, %v902
    %906 = vrot.lane.b32.xlu0 %v904, 16
    %v907 = vpop.permute.xlu0 %906
    %v909 = vadd.f32 %v899, %v907
    %v910 = vtanh.pop %v909
    %912 = vrot.lane.b32.xlu0 %v910, 32
    %v913 = vpop.permute.xlu0 %912
    %v915 = vmul.f32 %v897, %v913
    %917 = vrot.lane.b32.xlu0 %v915, 80
    %v918 = vpop.permute.xlu0 %917
    %s920 = scalar_lea.vmem [#allocation3], 24
    %921 = vst.msk [vmem:[%s920] sm:$0xf] %vm272, %v918
    %s922 = scalar_lea.vmem [#allocation4], 8
    %923 = vst.msk [vmem:[%s922 - $0x4] sm:$0xf0] %vm387, %v918
    %s924 = scalar_lea.vmem [#allocation2], 48
    %v925 = vld [vmem:[%s924] sm:$0xff]
    %v926 = vsel %vm279, %v918, 0
    %928 = vmatprep.subr.mxu0 0.0
    %929 = vmatpush1.msra.mxu0 0.0
    %930 = vmatprep.subr.mxu0 0.0
    %931 = vmatpush1.msra.mxu0 0.0
    %932 = vmatprep.subr.mxu0 0.0
    %933 = vmatpush1.msra.mxu0 0.0
    %934 = vmatprep.subr.mxu0 0.0
    %935 = vmatpush1.msra.mxu0 0.0
    %936 = vmatprep.subr.mxu0 0.0
    %937 = vmatpush1.msra.mxu0 0.0
    %938 = vmatprep.subr.mxu0 0.0
    %939 = vmatpush1.msra.mxu0 0.0
    %940 = vmatprep.subr.mxu0 0.0
    %941 = vmatpush1.msra.mxu0 0.0
    %942 = vmatprep.subr.mxu0 0.0
    %943 = vmatpush1.msra.mxu0 0.0
    %944 = vmatprep.subr.mxu0 0.0
    %945 = vmatpush1.msra.mxu0 0.0
    %946 = vmatprep.subr.mxu0 0.0
    %947 = vmatpush1.msra.mxu0 0.0
    %948 = vmatprep.subr.mxu0 0.0
    %949 = vmatpush1.msra.mxu0 0.0
    %950 = vmatprep.subr.mxu0 0.0
    %951 = vmatpush1.msra.mxu0 0.0
    %952 = vmatprep.subr.mxu0 0.0
    %953 = vmatpush1.msra.mxu0 0.0
    %954 = vmatprep.subr.mxu0 0.0
    %955 = vmatpush1.msra.mxu0 0.0
    %956 = vmatprep.subr.mxu0 0.0
    %957 = vmatpush1.msra.mxu0 %v277
    %958 = vmatprep.subr.mxu0 0.0
    %959 = vmatpush1.msra.mxu0 %v276
    %960 = vmatprep.subr.mxu0 0.0
    %961 = vmatpush2.msra.mxu0 0.0
    %962 = vmatprep.subr.mxu0 0.0
    %963 = vmatpush2.msra.mxu0 0.0
    %964 = vmatprep.subr.mxu0 0.0
    %965 = vmatpush2.msra.mxu0 0.0
    %966 = vmatprep.subr.mxu0 0.0
    %967 = vmatpush2.msra.mxu0 0.0
    %968 = vmatprep.subr.mxu0 0.0
    %969 = vmatpush2.msra.mxu0 0.0
    %970 = vmatprep.subr.mxu0 0.0
    %971 = vmatpush2.msra.mxu0 0.0
    %972 = vmatprep.subr.mxu0 0.0
    %973 = vmatpush2.msra.mxu0 0.0
    %974 = vmatprep.subr.mxu0 0.0
    %975 = vmatpush2.msra.mxu0 0.0
    %976 = vmatprep.subr.mxu0 0.0
    %977 = vmatpush2.msra.mxu0 0.0
    %978 = vmatprep.subr.mxu0 0.0
    %979 = vmatpush2.msra.mxu0 0.0
    %980 = vmatprep.subr.mxu0 0.0
    %981 = vmatpush2.msra.mxu0 0.0
    %982 = vmatprep.subr.mxu0 0.0
    %983 = vmatpush2.msra.mxu0 0.0
    %984 = vmatprep.subr.mxu0 0.0
    %985 = vmatpush2.msra.mxu0 0.0
    %986 = vmatprep.subr.mxu0 0.0
    %987 = vmatpush2.msra.mxu0 0.0
    %988 = vmatprep.subr.mxu0 0.0
    %989 = vmatpush2.msra.mxu0 0.0
    %990 = vmatprep.subr.mxu0 0.0
    %991 = vmatpush2.msra.mxu0 0.0
    %992 = vmatprep.mubr.f32.mxu0 0.0
    %993 = vmatmul.mubr.f32.gmra.mxu0 %v926
    %v994 = vpop.f32.mrf.mxu0
    %v995 = vadd.f32 0.0, %v994
    %v996 = vpop.f32.mrf.mxu0
    %997 = vdwg.mxu0
    %v998 = vadd.f32 %v925, %v995
    %v999 = vxor.u32 %v998, 2147483648
    %v1000 = vmul.f32 %v999, 1.442695
    %v1001 = vpow.pop %v1000
    %v1002 = vadd.f32 %v1001, 1.0
    %v1003 = vrcp.pop %v1002
    %v1004 = vmul.f32 1.0, %v1003
    %v1005 = vtanh.pop %v998
    %v1006 = vmul.f32 %v1004, %v909
    %1008 = vrot.lane.b32.xlu0 %v1005, 96
    %v1009 = vpop.permute.xlu0 %1008
    %v1011 = vmul.f32 %v1004, %v1009
    %1013 = vrot.lane.b32.xlu0 %v1011, 16
    %v1014 = vpop.permute.xlu0 %1013
    %v1016 = vadd.f32 %v1006, %v1014
    %v1017 = vtanh.pop %v1016
    %1019 = vrot.lane.b32.xlu0 %v1017, 32
    %v1020 = vpop.permute.xlu0 %1019
    %v1022 = vmul.f32 %v1004, %v1020
    %1024 = vrot.lane.b32.xlu0 %v1022, 80
    %v1025 = vpop.permute.xlu0 %1024
    %s1027 = scalar_lea.vmem [#allocation3], 28
    %1028 = vst.msk [vmem:[%s1027] sm:$0xf] %vm272, %v1025
    %s1029 = scalar_lea.vmem [#allocation4], 4
    %1030 = vst.msk [vmem:[%s1029 - $0x4] sm:$0xf0] %vm387, %v1025
    %s1031 = scalar_lea.vmem [#allocation2], 56
    %v1032 = vld [vmem:[%s1031] sm:$0xff]
    %v1033 = vsel %vm279, %v1025, 0
    %1035 = vmatprep.subr.mxu0 0.0
    %1036 = vmatpush1.msra.mxu0 0.0
    %1037 = vmatprep.subr.mxu0 0.0
    %1038 = vmatpush1.msra.mxu0 0.0
    %1039 = vmatprep.subr.mxu0 0.0
    %1040 = vmatpush1.msra.mxu0 0.0
    %1041 = vmatprep.subr.mxu0 0.0
    %1042 = vmatpush1.msra.mxu0 0.0
    %1043 = vmatprep.subr.mxu0 0.0
    %1044 = vmatpush1.msra.mxu0 0.0
    %1045 = vmatprep.subr.mxu0 0.0
    %1046 = vmatpush1.msra.mxu0 0.0
    %1047 = vmatprep.subr.mxu0 0.0
    %1048 = vmatpush1.msra.mxu0 0.0
    %1049 = vmatprep.subr.mxu0 0.0
    %1050 = vmatpush1.msra.mxu0 0.0
    %1051 = vmatprep.subr.mxu0 0.0
    %1052 = vmatpush1.msra.mxu0 0.0
    %1053 = vmatprep.subr.mxu0 0.0
    %1054 = vmatpush1.msra.mxu0 0.0
    %1055 = vmatprep.subr.mxu0 0.0
    %1056 = vmatpush1.msra.mxu0 0.0
    %1057 = vmatprep.subr.mxu0 0.0
    %1058 = vmatpush1.msra.mxu0 0.0
    %1059 = vmatprep.subr.mxu0 0.0
    %1060 = vmatpush1.msra.mxu0 0.0
    %1061 = vmatprep.subr.mxu0 0.0
    %1062 = vmatpush1.msra.mxu0 0.0
    %1063 = vmatprep.subr.mxu0 0.0
    %1064 = vmatpush1.msra.mxu0 %v277
    %1065 = vmatprep.subr.mxu0 0.0
    %1066 = vmatpush1.msra.mxu0 %v276
    %1067 = vmatprep.subr.mxu0 0.0
    %1068 = vmatpush2.msra.mxu0 0.0
    %1069 = vmatprep.subr.mxu0 0.0
    %1070 = vmatpush2.msra.mxu0 0.0
    %1071 = vmatprep.subr.mxu0 0.0
    %1072 = vmatpush2.msra.mxu0 0.0
    %1073 = vmatprep.subr.mxu0 0.0
    %1074 = vmatpush2.msra.mxu0 0.0
    %1075 = vmatprep.subr.mxu0 0.0
    %1076 = vmatpush2.msra.mxu0 0.0
    %1077 = vmatprep.subr.mxu0 0.0
    %1078 = vmatpush2.msra.mxu0 0.0
    %1079 = vmatprep.subr.mxu0 0.0
    %1080 = vmatpush2.msra.mxu0 0.0
    %1081 = vmatprep.subr.mxu0 0.0
    %1082 = vmatpush2.msra.mxu0 0.0
    %1083 = vmatprep.subr.mxu0 0.0
    %1084 = vmatpush2.msra.mxu0 0.0
    %1085 = vmatprep.subr.mxu0 0.0
    %1086 = vmatpush2.msra.mxu0 0.0
    %1087 = vmatprep.subr.mxu0 0.0
    %1088 = vmatpush2.msra.mxu0 0.0
    %1089 = vmatprep.subr.mxu0 0.0
    %1090 = vmatpush2.msra.mxu0 0.0
    %1091 = vmatprep.subr.mxu0 0.0
    %1092 = vmatpush2.msra.mxu0 0.0
    %1093 = vmatprep.subr.mxu0 0.0
    %1094 = vmatpush2.msra.mxu0 0.0
    %1095 = vmatprep.subr.mxu0 0.0
    %1096 = vmatpush2.msra.mxu0 0.0
    %1097 = vmatprep.subr.mxu0 0.0
    %1098 = vmatpush2.msra.mxu0 0.0
    %1099 = vmatprep.mubr.f32.mxu0 0.0
    %1100 = vmatmul.mubr.f32.gmra.mxu0 %v1033
    %v1101 = vpop.f32.mrf.mxu0
    %v1102 = vadd.f32 0.0, %v1101
    %v1103 = vpop.f32.mrf.mxu0
    %1104 = vdwg.mxu0
    %v1105 = vadd.f32 %v1032, %v1102
    %v1106 = vxor.u32 %v1105, 2147483648
    %v1107 = vmul.f32 %v1106, 1.442695
    %v1108 = vpow.pop %v1107
    %v1109 = vadd.f32 %v1108, 1.0
    %v1110 = vrcp.pop %v1109
    %v1111 = vmul.f32 1.0, %v1110
    %v1112 = vtanh.pop %v1105
    %v1113 = vmul.f32 %v1111, %v1016
    %1115 = vrot.lane.b32.xlu0 %v1112, 96
    %v1116 = vpop.permute.xlu0 %1115
    %v1118 = vmul.f32 %v1111, %v1116
    %1120 = vrot.lane.b32.xlu0 %v1118, 16
    %v1121 = vpop.permute.xlu0 %1120
    %v1123 = vadd.f32 %v1113, %v1121
    %v1124 = vtanh.pop %v1123
    %1126 = vrot.lane.b32.xlu0 %v1124, 32
    %v1127 = vpop.permute.xlu0 %1126
    %v1129 = vmul.f32 %v1111, %v1127
    %1131 = vrot.lane.b32.xlu0 %v1129, 80
    %v1132 = vpop.permute.xlu0 %1131
    %s1134 = scalar_lea.vmem [#allocation3], 32
    %1135 = vst.msk [vmem:[%s1134] sm:$0xf] %vm272, %v1132
    %1136 = vst.msk [vmem:[#allocation4 - $0x4] sm:$0xf0] %vm387, %v1132
    %v1137 = vld [vmem:[#allocation3] sm:$0xf]
    %v1138 = vld [vmem:[#allocation3 + $0x4] sm:$0xf]
    %v1139 = vld [vmem:[#allocation3 + $0x8] sm:$0xf]
    %v1140 = vld [vmem:[#allocation3 + $0xc] sm:$0xf]
    %v1141 = vld [vmem:[#allocation3 + $0x10] sm:$0xf]
    %v1142 = vld [vmem:[#allocation3 + $0x14] sm:$0xf]
    %v1143 = vld [vmem:[#allocation3 + $0x18] sm:$0xf]
    %v1144 = vld [vmem:[#allocation3 + $0x1c] sm:$0xf]
    %v1145 = vld [vmem:[%s1029] sm:$0xf]
    %v1146 = vld [vmem:[%s1029 + $0x4] sm:$0xf]
    %v1147 = vld [vmem:[%s1029 + $0x8] sm:$0xf]
    %v1148 = vld [vmem:[%s1029 + $0xc] sm:$0xf]
    %v1149 = vld [vmem:[%s1029 + $0x10] sm:$0xf]
    %v1150 = vld [vmem:[%s1029 + $0x14] sm:$0xf]
    %v1151 = vld [vmem:[%s1029 + $0x18] sm:$0xf]
    %v1152 = vld [vmem:[%s1029 + $0x1c] sm:$0xf]
    %v1153 = vld [vmem:[#allocation11] sm:$0xff]
    %v1154 = vld [vmem:[#allocation11 + $0x8] sm:$0xff]
    %v1155 = vld [vmem:[#allocation13] sm:$0xff]
    %v1156 = vld [vmem:[#allocation13 + $0x8] sm:$0xff]
    %v1165 = vcombine.low %v1145, %v1146
    %v1166 = vcombine.low %v1147, %v1148
    %v1167 = vcombine.low %v1149, %v1150
    %v1168 = vcombine.low %v1151, %v1152
    %v1169 = vsel %vm279, %v1165, 0
    %v1171 = vsel %vm279, %v1166, 0
    %v1173 = vsel %vm279, %v1167, 0
    %v1175 = vsel %vm279, %v1168, 0
    %1177 = vmatprep.subr.mxu0 0.0
    %1178 = vmatpush1.msra.mxu0 0.0
    %1179 = vmatprep.subr.mxu0 0.0
    %1180 = vmatpush1.msra.mxu0 0.0
    %1181 = vmatprep.subr.mxu0 0.0
    %1182 = vmatpush1.msra.mxu0 0.0
    %1183 = vmatprep.subr.mxu0 0.0
    %1184 = vmatpush1.msra.mxu0 0.0
    %1185 = vmatprep.subr.mxu0 0.0
    %1186 = vmatpush1.msra.mxu0 0.0
    %1187 = vmatprep.subr.mxu0 0.0
    %1188 = vmatpush1.msra.mxu0 0.0
    %1189 = vmatprep.subr.mxu0 0.0
    %1190 = vmatpush1.msra.mxu0 0.0
    %1191 = vmatprep.subr.mxu0 0.0
    %1192 = vmatpush1.msra.mxu0 0.0
    %1193 = vmatprep.subr.mxu0 0.0
    %1194 = vmatpush1.msra.mxu0 0.0
    %1195 = vmatprep.subr.mxu0 0.0
    %1196 = vmatpush1.msra.mxu0 0.0
    %1197 = vmatprep.subr.mxu0 0.0
    %1198 = vmatpush1.msra.mxu0 0.0
    %1199 = vmatprep.subr.mxu0 0.0
    %1200 = vmatpush1.msra.mxu0 0.0
    %1201 = vmatprep.subr.mxu0 0.0
    %1202 = vmatpush1.msra.mxu0 0.0
    %1203 = vmatprep.subr.mxu0 0.0
    %1204 = vmatpush1.msra.mxu0 0.0
    %1205 = vmatprep.subr.mxu0 0.0
    %1206 = vmatpush1.msra.mxu0 %v1156
    %1207 = vmatprep.subr.mxu0 0.0
    %1208 = vmatpush1.msra.mxu0 %v1155
    %1209 = vmatprep.subr.mxu0 0.0
    %1210 = vmatpush2.msra.mxu0 0.0
    %1211 = vmatprep.subr.mxu0 0.0
    %1212 = vmatpush2.msra.mxu0 0.0
    %1213 = vmatprep.subr.mxu0 0.0
    %1214 = vmatpush2.msra.mxu0 0.0
    %1215 = vmatprep.subr.mxu0 0.0
    %1216 = vmatpush2.msra.mxu0 0.0
    %1217 = vmatprep.subr.mxu0 0.0
    %1218 = vmatpush2.msra.mxu0 0.0
    %1219 = vmatprep.subr.mxu0 0.0
    %1220 = vmatpush2.msra.mxu0 0.0
    %1221 = vmatprep.subr.mxu0 0.0
    %1222 = vmatpush2.msra.mxu0 0.0
    %1223 = vmatprep.subr.mxu0 0.0
    %1224 = vmatpush2.msra.mxu0 0.0
    %1225 = vmatprep.subr.mxu0 0.0
    %1226 = vmatpush2.msra.mxu0 0.0
    %1227 = vmatprep.subr.mxu0 0.0
    %1228 = vmatpush2.msra.mxu0 0.0
    %1229 = vmatprep.subr.mxu0 0.0
    %1230 = vmatpush2.msra.mxu0 0.0
    %1231 = vmatprep.subr.mxu0 0.0
    %1232 = vmatpush2.msra.mxu0 0.0
    %1233 = vmatprep.subr.mxu0 0.0
    %1234 = vmatpush2.msra.mxu0 0.0
    %1235 = vmatprep.subr.mxu0 0.0
    %1236 = vmatpush2.msra.mxu0 0.0
    %1237 = vmatprep.subr.mxu0 0.0
    %1238 = vmatpush2.msra.mxu0 0.0
    %1239 = vmatprep.subr.mxu0 0.0
    %1240 = vmatpush2.msra.mxu0 0.0
    %1241 = vmatprep.mubr.f32.mxu0 0.0
    %1242 = vmatmul.mubr.f32.gmra.mxu0 %v1169
    %v1243 = vpop.f32.mrf.mxu0
    %v1244 = vadd.f32 0.0, %v1243
    %v1245 = vpop.f32.mrf.mxu0
    %1246 = vmatprep.mubr.f32.mxu0 0.0
    %1247 = vmatmul.mubr.f32.gmra.mxu0 %v1171
    %v1248 = vpop.f32.mrf.mxu0
    %v1249 = vadd.f32 0.0, %v1248
    %v1250 = vpop.f32.mrf.mxu0
    %1251 = vmatprep.mubr.f32.mxu0 0.0
    %1252 = vmatmul.mubr.f32.gmra.mxu0 %v1173
    %v1253 = vpop.f32.mrf.mxu0
    %v1254 = vadd.f32 0.0, %v1253
    %v1255 = vpop.f32.mrf.mxu0
    %1256 = vmatprep.mubr.f32.mxu0 0.0
    %1257 = vmatmul.mubr.f32.gmra.mxu0 %v1175
    %v1258 = vpop.f32.mrf.mxu0
    %v1259 = vadd.f32 0.0, %v1258
    %v1260 = vpop.f32.mrf.mxu0
    %1261 = vdwg.mxu0
    %v1270 = vcombine.low %v1137, %v1138
    %v1271 = vcombine.low %v1139, %v1140
    %v1272 = vcombine.low %v1141, %v1142
    %v1273 = vcombine.low %v1143, %v1144
    %v1274 = vsel %vm279, %v1270, 0
    %v1276 = vsel %vm279, %v1271, 0
    %v1278 = vsel %vm279, %v1272, 0
    %v1280 = vsel %vm279, %v1273, 0
    %1282 = vmatprep.subr.mxu0 0.0
    %1283 = vmatpush1.msra.mxu0 0.0
    %1284 = vmatprep.subr.mxu0 0.0
    %1285 = vmatpush1.msra.mxu0 0.0
    %1286 = vmatprep.subr.mxu0 0.0
    %1287 = vmatpush1.msra.mxu0 0.0
    %1288 = vmatprep.subr.mxu0 0.0
    %1289 = vmatpush1.msra.mxu0 0.0
    %1290 = vmatprep.subr.mxu0 0.0
    %1291 = vmatpush1.msra.mxu0 0.0
    %1292 = vmatprep.subr.mxu0 0.0
    %1293 = vmatpush1.msra.mxu0 0.0
    %1294 = vmatprep.subr.mxu0 0.0
    %1295 = vmatpush1.msra.mxu0 0.0
    %1296 = vmatprep.subr.mxu0 0.0
    %1297 = vmatpush1.msra.mxu0 0.0
    %1298 = vmatprep.subr.mxu0 0.0
    %1299 = vmatpush1.msra.mxu0 0.0
    %1300 = vmatprep.subr.mxu0 0.0
    %1301 = vmatpush1.msra.mxu0 0.0
    %1302 = vmatprep.subr.mxu0 0.0
    %1303 = vmatpush1.msra.mxu0 0.0
    %1304 = vmatprep.subr.mxu0 0.0
    %1305 = vmatpush1.msra.mxu0 0.0
    %1306 = vmatprep.subr.mxu0 0.0
    %1307 = vmatpush1.msra.mxu0 0.0
    %1308 = vmatprep.subr.mxu0 0.0
    %1309 = vmatpush1.msra.mxu0 0.0
    %1310 = vmatprep.subr.mxu0 0.0
    %1311 = vmatpush1.msra.mxu0 %v1154
    %1312 = vmatprep.subr.mxu0 0.0
    %1313 = vmatpush1.msra.mxu0 %v1153
    %1314 = vmatprep.subr.mxu0 0.0
    %1315 = vmatpush2.msra.mxu0 0.0
    %1316 = vmatprep.subr.mxu0 0.0
    %1317 = vmatpush2.msra.mxu0 0.0
    %1318 = vmatprep.subr.mxu0 0.0
    %1319 = vmatpush2.msra.mxu0 0.0
    %1320 = vmatprep.subr.mxu0 0.0
    %1321 = vmatpush2.msra.mxu0 0.0
    %1322 = vmatprep.subr.mxu0 0.0
    %1323 = vmatpush2.msra.mxu0 0.0
    %1324 = vmatprep.subr.mxu0 0.0
    %1325 = vmatpush2.msra.mxu0 0.0
    %1326 = vmatprep.subr.mxu0 0.0
    %1327 = vmatpush2.msra.mxu0 0.0
    %1328 = vmatprep.subr.mxu0 0.0
    %1329 = vmatpush2.msra.mxu0 0.0
    %1330 = vmatprep.subr.mxu0 0.0
    %1331 = vmatpush2.msra.mxu0 0.0
    %1332 = vmatprep.subr.mxu0 0.0
    %1333 = vmatpush2.msra.mxu0 0.0
    %1334 = vmatprep.subr.mxu0 0.0
    %1335 = vmatpush2.msra.mxu0 0.0
    %1336 = vmatprep.subr.mxu0 0.0
    %1337 = vmatpush2.msra.mxu0 0.0
    %1338 = vmatprep.subr.mxu0 0.0
    %1339 = vmatpush2.msra.mxu0 0.0
    %1340 = vmatprep.subr.mxu0 0.0
    %1341 = vmatpush2.msra.mxu0 0.0
    %1342 = vmatprep.subr.mxu0 0.0
    %1343 = vmatpush2.msra.mxu0 0.0
    %1344 = vmatprep.subr.mxu0 0.0
    %1345 = vmatpush2.msra.mxu0 0.0
    %1346 = vmatprep.mubr.f32.mxu0 0.0
    %1347 = vmatmul.mubr.f32.gmra.mxu0 %v1274
    %v1348 = vpop.f32.mrf.mxu0
    %v1349 = vadd.f32 %v1244, %v1348
    %v1350 = vpop.f32.mrf.mxu0
    %1351 = vmatprep.mubr.f32.mxu0 0.0
    %1352 = vmatmul.mubr.f32.gmra.mxu0 %v1276
    %v1353 = vpop.f32.mrf.mxu0
    %v1354 = vadd.f32 %v1249, %v1353
    %v1355 = vpop.f32.mrf.mxu0
    %1356 = vmatprep.mubr.f32.mxu0 0.0
    %1357 = vmatmul.mubr.f32.gmra.mxu0 %v1278
    %v1358 = vpop.f32.mrf.mxu0
    %v1359 = vadd.f32 %v1254, %v1358
    %v1360 = vpop.f32.mrf.mxu0
    %1361 = vmatprep.mubr.f32.mxu0 0.0
    %1362 = vmatmul.mubr.f32.gmra.mxu0 %v1280
    %v1363 = vpop.f32.mrf.mxu0
    %v1364 = vadd.f32 %v1259, %v1363
    %v1365 = vpop.f32.mrf.mxu0
    %1366 = vdwg.mxu0
    %v1367 = vld [vmem:[%s6] sm:$0x1]
    %v1369 = vlaneseq
    %v1370 = vshrl.u32 %v1369, 7
    %v1371 = vsub.s32 0, %v1370
    %v1372 = vrot.slane %v1367, %v1371
    %v1374 = vadd.f32 %v1349, %v1372
    %v1375 = vadd.f32 %v1354, %v1372
    %v1376 = vadd.f32 %v1359, %v1372
    %v1377 = vadd.f32 %v1364, %v1372
    %1378 = vmax.xlane.f32.xlu0 %v1374
    %v1379 = vpop.xlane.xlu0 %1378
    %1380 = vmax.xlane.f32.xlu0 %v1375
    %v1381 = vpop.xlane.xlu0 %1380
    %1382 = vmax.xlane.f32.xlu0 %v1376
    %v1383 = vpop.xlane.xlu0 %1382
    %1384 = vmax.xlane.f32.xlu0 %v1377
    %v1385 = vpop.xlane.xlu0 %1384
    %v1386 = vsub.f32 %v1374, %v1379
    %v1387 = vsub.f32 %v1375, %v1381
    %v1388 = vsub.f32 %v1376, %v1383
    %v1389 = vsub.f32 %v1377, %v1385
    %v1390 = vmul.f32 %v1386, 1.442695
    %v1391 = vpow.pop %v1390
    %v1392 = vmul.f32 %v1387, 1.442695
    %v1393 = vpow.pop %v1392
    %v1394 = vmul.f32 %v1388, 1.442695
    %v1395 = vpow.pop %v1394
    %v1396 = vmul.f32 %v1389, 1.442695
    %v1397 = vpow.pop %v1396
    %1398 = vadd.xlane.f32.xlu0 %v1391
    %v1399 = vpop.xlane.xlu0 %1398
    %1400 = vadd.xlane.f32.xlu0 %v1393
    %v1401 = vpop.xlane.xlu0 %1400
    %1402 = vadd.xlane.f32.xlu0 %v1395
    %v1403 = vpop.xlane.xlu0 %1402
    %1404 = vadd.xlane.f32.xlu0 %v1397
    %v1405 = vpop.xlane.xlu0 %1404
    %v1406 = vlog2.pop %v1399
    %v1407 = vmul.f32 %v1406, 0.6931472
    %v1408 = vlog2.pop %v1401
    %v1409 = vmul.f32 %v1408, 0.6931472
    %v1410 = vlog2.pop %v1403
    %v1411 = vmul.f32 %v1410, 0.6931472
    %v1412 = vlog2.pop %v1405
    %v1413 = vmul.f32 %v1412, 0.6931472
    %v1414 = vsub.f32 %v1386, %v1407
    %v1415 = vsub.f32 %v1387, %v1409
    %v1416 = vsub.f32 %v1388, %v1411
    %v1417 = vsub.f32 %v1389, %v1413
    %1418 = vst [vmem:[#allocation14] sm:$0xff] %v1414
    %1419 = vst [vmem:[#allocation14 + $0x8] sm:$0xff] %v1415
    %1420 = vst [vmem:[#allocation14 + $0x10] sm:$0xff] %v1416
    %1421 = vst [vmem:[#allocation14 + $0x18] sm:$0xff] %v1417
    // Predicated region
    $region58: #{tpu_custom_call.1} parent=1 // pred_check
      _
    $region59: #{tpu_custom_call.1} parent=1 // pred_check_branch
      %1423 = sbr.rel (0) target = $region61
    $region60: #{tpu_custom_call.1} parent=1 // pred_region
      %s1425 = ssub.s32 512, 512
      %1426 = vsyncadd [#allocation7], %s1425
      %s1427 = sshll.u32 [#allocation14], 4
      %s1428 = int_to_ptr.vmem [resolvable:$true] %s1427
      %1433 = dma.vmem_to_hbm [thread:$0]  %s1428, 512, %s9, [#allocation7], 128, 128, 8
    $region61: #{tpu_custom_call.1} parent=1 // pred_fallthru
      _
    // Predicated region
    $region62: #{tpu_custom_call.1} parent=1 // pred_check
      _
    $region63: #{tpu_custom_call.1} parent=1 // pred_check_branch
      %1435 = sbr.rel (0) target = $region65
    $region64: #{tpu_custom_call.1} parent=1 // pred_region
      %1436 = dma.done [#allocation7], 512
    $region65: #{tpu_custom_call.1} parent=1 // pred_fallthru
      _
    %1437 = vsyncpa [#allocation6], 1
    %1438 = vsyncpa [#allocation9], 1
    %1439 = vsyncpa [#allocation12], 1
    %1440 = vsyncpa [#allocation7], 1

</llo_original>
